<compile_context>
chip_gen: v7x
topology: tpu7x:2x2x1
jax: 0.10.0
libtpu: 0.0.40
codegen_flags: <defaults>
</compile_context>

<pallas_src>
import functools

import jax
import jax.numpy as jnp
from jax import lax
from jax.experimental import pallas as pl
from jax.experimental.pallas import tpu as pltpu

BN_EPS = 1e-5
QOFF = 128     # lane offset of the real data inside the flat-padded row layout


def _round_up(n, m):
    return ((n + m - 1) // m) * m


def _resblock_kernel(x_ref, w1_ref, w2_ref, aux_ref, out_ref,
                     col_ref, hpad_ref, *, H, W):
    """conv1 -> ReLU -> BatchNorm(batch stats) -> conv2, channels-major / lane-dense.

    x_ref   : (B, Cin_pad, 2*QOFF + H*W)   flat-padded NCHW input (zeros outside
                                           lanes [QOFF, QOFF+H*W))
    w1_ref  : (Cmid, 9*Cin_pad)            conv1 taps, tap-major along K
    w2_ref  : (Cout, 9*Cmid)               conv2 taps, tap-major along K
    aux_ref : (rows_aux, 4)                columns: b1, gamma, beta, b2 (padded)
    out_ref : (B, Cout, H*W)               flattened NCHW output
    col_ref : (9*Cmid, H*W)                scratch im2col (conv1 uses rows [0, 9*Cin_pad))
    hpad_ref: (Cmid, 2*QOFF + H*W)         scratch flat-padded intermediate
    """
    B, cin_pad, _ = x_ref.shape
    cmid = w1_ref.shape[0]
    cout = w2_ref.shape[0]
    HW = H * W
    K1 = 9 * cin_pad
    base = QOFF - W - 1                      # window start of tap (dy=0, dx=0)

    # Horizontal-halo masks (the vertical halo is covered by the zero lanes of
    # the flat-padded layout).  Kept as f32 so masking is a plain broadcasted mul.
    lane = lax.broadcasted_iota(jnp.int32, (1, HW), 1)
    xc = lane % W
    mask_l = (xc >= 1).astype(jnp.float32)           # tap reads column x-1
    mask_r = (xc < (W - 1)).astype(jnp.float32)      # tap reads column x+1

    def gather_taps(read, rows):
        # Build the (9*rows, HW) im2col block from 9 statically shifted windows.
        # All col_ref stores are sublane-aligned (rows is a multiple of 8) and
        # full-lane (HW is a multiple of 128) -> unmasked vector stores.
        for dy in range(3):
            for dx in range(3):
                piece = read(base + dy * W + dx)      # (rows, HW)
                if dx == 0:
                    piece = piece * mask_l
                elif dx == 2:
                    piece = piece * mask_r
                col_ref[pl.ds((dy * 3 + dx) * rows, rows), :] = piece

    # Zero the intermediate buffer once; only its (lane-aligned) interior is
    # rewritten per batch.
    hpad_ref[...] = jnp.zeros_like(hpad_ref)

    # ---- phase 1: conv1 (single K=9*Cin_pad matmul) + bias + ReLU; fused BN stats ----
    b1c = aux_ref[0:cmid, 0:1]                         # (Cmid, 1)
    h_per_batch = []
    s1 = jnp.zeros((cmid, 1), jnp.float32)
    s2 = jnp.zeros((cmid, 1), jnp.float32)
    for b in range(B):
        gather_taps(lambda off, b=b: x_ref[b, :, pl.ds(off, HW)], cin_pad)
        hb = jnp.dot(w1_ref[...], col_ref[pl.ds(0, K1), :],
                     preferred_element_type=jnp.float32)          # (Cmid, HW)
        hb = jnp.maximum(hb + b1c, 0.0)
        s1 = s1 + jnp.sum(hb, axis=1, keepdims=True)
        s2 = s2 + jnp.sum(hb * hb, axis=1, keepdims=True)
        h_per_batch.append(hb)

    # ---- BatchNorm2d (training mode): batch mean / biased variance per channel ----
    n = jnp.float32(B * HW)
    mean = s1 / n
    var = s2 / n - mean * mean
    inv = lax.rsqrt(var + BN_EPS)
    scale = aux_ref[0:cmid, 1:2] * inv                 # gamma * inv        (Cmid, 1)
    shift = aux_ref[0:cmid, 2:3] - mean * scale        # beta - mean*scale  (Cmid, 1)
    b2c = aux_ref[0:cout, 3:4]                         # (Cout, 1)

    # ---- phase 2: normalize + conv2 (single K=9*Cmid matmul) per batch ----
    for b in range(B):
        hpad_ref[:, pl.ds(QOFF, HW)] = h_per_batch[b] * scale + shift
        gather_taps(lambda off: hpad_ref[:, pl.ds(off, HW)], cmid)
        ob = jnp.dot(w2_ref[...], col_ref[...],
                     preferred_element_type=jnp.float32)          # (Cout, HW)
        out_ref[b] = ob + b2c


@jax.jit
def model_forward(t, x_nchw, params):
    """Forward pass.  `t` does not affect the returned value of the reference."""
    del t  # tensor `a` built from `t` in the PyTorch forward is dead code
    w1, b1, gamma, beta, w2, b2 = (params[k] for k in
                                   ("w1", "b1", "gamma", "beta", "w2", "b2"))
    B, C, H, W = x_nchw.shape
    HW = H * W
    cmid = w1.shape[-1]
    cout = w2.shape[-1]
    cin_pad = _round_up(C, 8)        # sublane-align the conv1 im2col rows
    assert W + 1 <= QOFF, "spatial width too large for the flat-padded layout"

    # Flat-padded NCHW input: zeros everywhere except lanes [QOFF, QOFF+HW).
    # (pad/reshape only -- no NCHW<->NHWC transposes on either side.)
    xf = jnp.pad(x_nchw.astype(jnp.float32).reshape(B, C, HW),
                 ((0, 0), (0, cin_pad - C), (QOFF, QOFF)))

    # conv1 weights -> (Cmid, 9*Cin_pad), conv2 weights -> (Cout, 9*Cmid), tap-major K.
    w1p = jnp.pad(w1.astype(jnp.float32), ((0, 0), (0, cin_pad - C), (0, 0)))
    w1m = jnp.transpose(w1p, (2, 0, 1)).reshape(cmid, 9 * cin_pad)
    w2m = jnp.transpose(w2.astype(jnp.float32), (2, 0, 1)).reshape(cout, 9 * cmid)

    # Pack the four small per-channel vectors into one tiny input.
    rows_aux = max(cmid, cout)

    def _padv(v):
        v = v.astype(jnp.float32)
        return jnp.pad(v, (0, rows_aux - v.shape[0]))

    aux = jnp.stack([_padv(b1), _padv(gamma), _padv(beta), _padv(b2)], axis=1)

    kernel = functools.partial(_resblock_kernel, H=H, W=W)
    out_flat = pl.pallas_call(
        kernel,
        out_shape=jax.ShapeDtypeStruct((B, cout, HW), jnp.float32),
        in_specs=[pl.BlockSpec(memory_space=pltpu.MemorySpace.VMEM)] * 4,
        out_specs=pl.BlockSpec(memory_space=pltpu.MemorySpace.VMEM),
        scratch_shapes=[
            pltpu.VMEM((9 * cmid, HW), jnp.float32),          # shared im2col buffer
            pltpu.VMEM((cmid, 2 * QOFF + HW), jnp.float32),   # flat-padded intermediate
        ],
    )(xf, w1m, w2m, aux)

    return out_flat.reshape(B, cout, H, W)


def init_params(key, inchannels, cmid=16):
    """Deterministic init matching the parameter shapes of Model.__init__."""
    k1, k2, k3, k4 = jax.random.split(key, 4)
    bnd1 = 1.0 / jnp.sqrt(inchannels * 9.0)
    bnd2 = 1.0 / jnp.sqrt(cmid * 9.0)
    # conv weights stored as [9, Cin, Cout]  (flattened HWIO taps)
    w1 = jax.random.uniform(k1, (9, inchannels, cmid), jnp.float32, -bnd1, bnd1)
    b1 = jax.random.uniform(k2, (cmid,), jnp.float32, -bnd1, bnd1)
    w2 = jax.random.uniform(k3, (9, cmid, inchannels), jnp.float32, -bnd2, bnd2)
    b2 = jax.random.uniform(k4, (inchannels,), jnp.float32, -bnd2, bnd2)
    gamma = jnp.ones((cmid,), jnp.float32)     # BatchNorm2d default init
    beta = jnp.zeros((cmid,), jnp.float32)
    return dict(w1=w1, b1=b1, gamma=gamma, beta=beta, w2=w2, b2=b2)


def reference_forward(t, x_nchw, params):
    """Pure-JAX reference (lax.conv) mirroring the PyTorch forward."""
    del t
    w1, b1, gamma, beta, w2, b2 = (params[k] for k in
                                   ("w1", "b1", "gamma", "beta", "w2", "b2"))
    Cin, Cmid = w1.shape[1], w1.shape[2]
    Cout = w2.shape[2]
    x = jnp.transpose(x_nchw, (0, 2, 3, 1)).astype(jnp.float32)
    dn = ("NHWC", "HWIO", "NHWC")
    h = lax.conv_general_dilated(x, w1.reshape(3, 3, Cin, Cmid), (1, 1), "SAME",
                                 dimension_numbers=dn) + b1.reshape(1, 1, 1, Cmid)
    h = jnp.maximum(h, 0.0)
    mean = jnp.mean(h, axis=(0, 1, 2), keepdims=True)
    var = jnp.mean((h - mean) ** 2, axis=(0, 1, 2), keepdims=True)
    h = (h - mean) * lax.rsqrt(var + BN_EPS) * gamma.reshape(1, 1, 1, Cmid) \
        + beta.reshape(1, 1, 1, Cmid)
    o = lax.conv_general_dilated(h, w2.reshape(3, 3, Cmid, Cout), (1, 1), "SAME",
                                 dimension_numbers=dn) + b2.reshape(1, 1, 1, Cout)
    return jnp.transpose(o, (0, 3, 1, 2))


if __name__ == "__main__":
    key = jax.random.PRNGKey(0)
    k_x, k_p = jax.random.split(key)

    B, C, H, W = 2, 4, 16, 16            # inchannels = 4
    x = jax.random.normal(k_x, (B, C, H, W), jnp.float32)
    t = jnp.float32(0.5)                 # unused by the forward's return value
    params = init_params(k_p, inchannels=C, cmid=16)

    out = jax.block_until_ready(model_forward(t, x, params))
    ref = reference_forward(t, x, params)

    assert out.shape == (B, C, H, W), out.shape
    max_err = float(jnp.max(jnp.abs(out - ref)))
    assert jnp.allclose(out, ref, rtol=1e-4, atol=1e-4), max_err

    print("KERNEL_OK")
</pallas_src>

<mosaic_0001>
module attributes {stable_mosaic.version = 11 : i64} {
  func.func @_resblock_kernel(%arg0: memref<2x8x512xf32, #tpu.memory_space<vmem>>, %arg1: memref<16x72xf32, #tpu.memory_space<vmem>>, %arg2: memref<4x144xf32, #tpu.memory_space<vmem>>, %arg3: memref<16x4xf32, #tpu.memory_space<vmem>>, %arg4: memref<2x4x256xf32, #tpu.memory_space<vmem>>, %arg5: memref<144x256xf32, #tpu.memory_space<vmem>>, %arg6: memref<16x512xf32, #tpu.memory_space<vmem>>) attributes {dimension_semantics = [], scalar_prefetch = 0 : i64, scratch_operands = 2 : i64, tpu.core_type = #tpu.core_type<tc>} {
    %0 = tpu.iota {dimensions = array<i32: 1>} : vector<1x256xi32>
    %c16_i32 = arith.constant 16 : i32
    %c0_i32 = arith.constant 0 : i32
    %1 = arith.cmpi eq, %c16_i32, %c0_i32 : i32
    %c1_i32 = arith.constant 1 : i32
    %2 = arith.select %1, %c1_i32, %c16_i32 : i32
    %3 = vector.broadcast %2 : i32 to vector<1x256xi32>
    %4 = arith.remsi %0, %3 : vector<1x256xi32>
    %c0_i32_0 = arith.constant 0 : i32
    %5 = vector.broadcast %c0_i32_0 : i32 to vector<1x256xi32>
    %6 = arith.cmpi ne, %4, %5 : vector<1x256xi32>
    %c0_i32_1 = arith.constant 0 : i32
    %7 = vector.broadcast %c0_i32_1 : i32 to vector<1x256xi32>
    %8 = arith.cmpi slt, %4, %7 : vector<1x256xi32>
    %c0_i32_2 = arith.constant 0 : i32
    %9 = arith.cmpi slt, %2, %c0_i32_2 : i32
    %10 = vector.broadcast %9 : i1 to vector<1x256xi1>
    %11 = vector.broadcast %10 : vector<1x256xi1> to vector<1x256xi1>
    %12 = arith.xori %8, %11 : vector<1x256xi1>
    %13 = arith.andi %12, %6 : vector<1x256xi1>
    %14 = vector.broadcast %2 : i32 to vector<1x256xi32>
    %15 = arith.addi %4, %14 : vector<1x256xi32>
    %16 = arith.select %13, %15, %4 : vector<1x256xi1>, vector<1x256xi32>
    %c1_i32_3 = arith.constant 1 : i32
    %17 = vector.broadcast %c1_i32_3 : i32 to vector<1x256xi32>
    %18 = arith.cmpi sge, %16, %17 : vector<1x256xi32>
    %19 = arith.extui %18 : vector<1x256xi1> to vector<1x256xi32>
    %20 = arith.sitofp %19 : vector<1x256xi32> to vector<1x256xf32>
    %c15_i32 = arith.constant 15 : i32
    %21 = vector.broadcast %c15_i32 : i32 to vector<1x256xi32>
    %22 = arith.cmpi slt, %16, %21 : vector<1x256xi32>
    %23 = arith.extui %22 : vector<1x256xi1> to vector<1x256xi32>
    %24 = arith.sitofp %23 : vector<1x256xi32> to vector<1x256xf32>
    %cst = arith.constant 0.000000e+00 : f32
    %25 = vector.broadcast %cst : f32 to vector<16x512xf32>
    %c0 = arith.constant 0 : index
    %c0_4 = arith.constant 0 : index
    %26 = vector.load %arg6[%c0, %c0_4] : memref<16x512xf32, #tpu.memory_space<vmem>>, vector<16x512xf32>
    tpu.vector_store %arg6[%c0, %c0_4], %25 {strides = array<i32>} : memref<16x512xf32, #tpu.memory_space<vmem>>, vector<16x512xf32>,
    %c0_5 = arith.constant 0 : index
    %c0_6 = arith.constant 0 : index
    %27 = vector.load %arg3[%c0_5, %c0_6] : memref<16x4xf32, #tpu.memory_space<vmem>>, vector<16x1xf32>
    %cst_7 = arith.constant 0.000000e+00 : f32
    %28 = vector.broadcast %cst_7 : f32 to vector<16x1xf32>
    %cst_8 = arith.constant 0.000000e+00 : f32
    %29 = vector.broadcast %cst_8 : f32 to vector<16x1xf32>
    %c0_9 = arith.constant 0 : index
    %c0_10 = arith.constant 0 : index
    %c111 = arith.constant 111 : index
    %30 = vector.load %arg0[%c0_9, %c0_10, %c111] : memref<2x8x512xf32, #tpu.memory_space<vmem>>, vector<1x8x256xf32>
    %31 = vector.shape_cast %30 : vector<1x8x256xf32> to vector<8x256xf32>
    %32 = vector.broadcast %20 : vector<1x256xf32> to vector<8x256xf32>
    %33 = arith.mulf %31, %32 : vector<8x256xf32>
    %c0_11 = arith.constant 0 : index
    %c0_12 = arith.constant 0 : index
    %34 = vector.load %arg5[%c0_11, %c0_12] : memref<144x256xf32, #tpu.memory_space<vmem>>, vector<8x256xf32>
    tpu.vector_store %arg5[%c0_11, %c0_12], %33 {strides = array<i32>} : memref<144x256xf32, #tpu.memory_space<vmem>>, vector<8x256xf32>,
    %c0_13 = arith.constant 0 : index
    %c0_14 = arith.constant 0 : index
    %c112 = arith.constant 112 : index
    %35 = vector.load %arg0[%c0_13, %c0_14, %c112] : memref<2x8x512xf32, #tpu.memory_space<vmem>>, vector<1x8x256xf32>
    %36 = vector.shape_cast %35 : vector<1x8x256xf32> to vector<8x256xf32>
    %c8 = arith.constant 8 : index
    %c0_15 = arith.constant 0 : index
    %37 = vector.load %arg5[%c8, %c0_15] : memref<144x256xf32, #tpu.memory_space<vmem>>, vector<8x256xf32>
    tpu.vector_store %arg5[%c8, %c0_15], %36 {strides = array<i32>} : memref<144x256xf32, #tpu.memory_space<vmem>>, vector<8x256xf32>,
    %c0_16 = arith.constant 0 : index
    %c0_17 = arith.constant 0 : index
    %c113 = arith.constant 113 : index
    %38 = vector.load %arg0[%c0_16, %c0_17, %c113] : memref<2x8x512xf32, #tpu.memory_space<vmem>>, vector<1x8x256xf32>
    %39 = vector.shape_cast %38 : vector<1x8x256xf32> to vector<8x256xf32>
    %40 = vector.broadcast %24 : vector<1x256xf32> to vector<8x256xf32>
    %41 = arith.mulf %39, %40 : vector<8x256xf32>
    %c16 = arith.constant 16 : index
    %c0_18 = arith.constant 0 : index
    %42 = vector.load %arg5[%c16, %c0_18] : memref<144x256xf32, #tpu.memory_space<vmem>>, vector<8x256xf32>
    tpu.vector_store %arg5[%c16, %c0_18], %41 {strides = array<i32>} : memref<144x256xf32, #tpu.memory_space<vmem>>, vector<8x256xf32>,
    %c0_19 = arith.constant 0 : index
    %c0_20 = arith.constant 0 : index
    %c127 = arith.constant 127 : index
    %43 = vector.load %arg0[%c0_19, %c0_20, %c127] : memref<2x8x512xf32, #tpu.memory_space<vmem>>, vector<1x8x256xf32>
    %44 = vector.shape_cast %43 : vector<1x8x256xf32> to vector<8x256xf32>
    %45 = vector.broadcast %20 : vector<1x256xf32> to vector<8x256xf32>
    %46 = arith.mulf %44, %45 : vector<8x256xf32>
    %c24 = arith.constant 24 : index
    %c0_21 = arith.constant 0 : index
    %47 = vector.load %arg5[%c24, %c0_21] : memref<144x256xf32, #tpu.memory_space<vmem>>, vector<8x256xf32>
    tpu.vector_store %arg5[%c24, %c0_21], %46 {strides = array<i32>} : memref<144x256xf32, #tpu.memory_space<vmem>>, vector<8x256xf32>,
    %c0_22 = arith.constant 0 : index
    %c0_23 = arith.constant 0 : index
    %c128 = arith.constant 128 : index
    %48 = vector.load %arg0[%c0_22, %c0_23, %c128] : memref<2x8x512xf32, #tpu.memory_space<vmem>>, vector<1x8x256xf32>
    %49 = vector.shape_cast %48 : vector<1x8x256xf32> to vector<8x256xf32>
    %c32 = arith.constant 32 : index
    %c0_24 = arith.constant 0 : index
    %50 = vector.load %arg5[%c32, %c0_24] : memref<144x256xf32, #tpu.memory_space<vmem>>, vector<8x256xf32>
    tpu.vector_store %arg5[%c32, %c0_24], %49 {strides = array<i32>} : memref<144x256xf32, #tpu.memory_space<vmem>>, vector<8x256xf32>,
    %c0_25 = arith.constant 0 : index
    %c0_26 = arith.constant 0 : index
    %c129 = arith.constant 129 : index
    %51 = vector.load %arg0[%c0_25, %c0_26, %c129] : memref<2x8x512xf32, #tpu.memory_space<vmem>>, vector<1x8x256xf32>
    %52 = vector.shape_cast %51 : vector<1x8x256xf32> to vector<8x256xf32>
    %53 = vector.broadcast %24 : vector<1x256xf32> to vector<8x256xf32>
    %54 = arith.mulf %52, %53 : vector<8x256xf32>
    %c40 = arith.constant 40 : index
    %c0_27 = arith.constant 0 : index
    %55 = vector.load %arg5[%c40, %c0_27] : memref<144x256xf32, #tpu.memory_space<vmem>>, vector<8x256xf32>
    tpu.vector_store %arg5[%c40, %c0_27], %54 {strides = array<i32>} : memref<144x256xf32, #tpu.memory_space<vmem>>, vector<8x256xf32>,
    %c0_28 = arith.constant 0 : index
    %c0_29 = arith.constant 0 : index
    %c143 = arith.constant 143 : index
    %56 = vector.load %arg0[%c0_28, %c0_29, %c143] : memref<2x8x512xf32, #tpu.memory_space<vmem>>, vector<1x8x256xf32>
    %57 = vector.shape_cast %56 : vector<1x8x256xf32> to vector<8x256xf32>
    %58 = vector.broadcast %20 : vector<1x256xf32> to vector<8x256xf32>
    %59 = arith.mulf %57, %58 : vector<8x256xf32>
    %c48 = arith.constant 48 : index
    %c0_30 = arith.constant 0 : index
    %60 = vector.load %arg5[%c48, %c0_30] : memref<144x256xf32, #tpu.memory_space<vmem>>, vector<8x256xf32>
    tpu.vector_store %arg5[%c48, %c0_30], %59 {strides = array<i32>} : memref<144x256xf32, #tpu.memory_space<vmem>>, vector<8x256xf32>,
    %c0_31 = arith.constant 0 : index
    %c0_32 = arith.constant 0 : index
    %c144 = arith.constant 144 : index
    %61 = vector.load %arg0[%c0_31, %c0_32, %c144] : memref<2x8x512xf32, #tpu.memory_space<vmem>>, vector<1x8x256xf32>
    %62 = vector.shape_cast %61 : vector<1x8x256xf32> to vector<8x256xf32>
    %c56 = arith.constant 56 : index
    %c0_33 = arith.constant 0 : index
    %63 = vector.load %arg5[%c56, %c0_33] : memref<144x256xf32, #tpu.memory_space<vmem>>, vector<8x256xf32>
    tpu.vector_store %arg5[%c56, %c0_33], %62 {strides = array<i32>} : memref<144x256xf32, #tpu.memory_space<vmem>>, vector<8x256xf32>,
    %c0_34 = arith.constant 0 : index
    %c0_35 = arith.constant 0 : index
    %c145 = arith.constant 145 : index
    %64 = vector.load %arg0[%c0_34, %c0_35, %c145] : memref<2x8x512xf32, #tpu.memory_space<vmem>>, vector<1x8x256xf32>
    %65 = vector.shape_cast %64 : vector<1x8x256xf32> to vector<8x256xf32>
    %66 = vector.broadcast %24 : vector<1x256xf32> to vector<8x256xf32>
    %67 = arith.mulf %65, %66 : vector<8x256xf32>
    %c64 = arith.constant 64 : index
    %c0_36 = arith.constant 0 : index
    %68 = vector.load %arg5[%c64, %c0_36] : memref<144x256xf32, #tpu.memory_space<vmem>>, vector<8x256xf32>
    tpu.vector_store %arg5[%c64, %c0_36], %67 {strides = array<i32>} : memref<144x256xf32, #tpu.memory_space<vmem>>, vector<8x256xf32>,
    %c0_37 = arith.constant 0 : index
    %c0_38 = arith.constant 0 : index
    %69 = vector.load %arg1[%c0_37, %c0_38] : memref<16x72xf32, #tpu.memory_space<vmem>>, vector<16x72xf32>
    %c0_39 = arith.constant 0 : index
    %c0_40 = arith.constant 0 : index
    %70 = vector.load %arg5[%c0_39, %c0_40] : memref<144x256xf32, #tpu.memory_space<vmem>>, vector<72x256xf32>
    %cst_41 = arith.constant dense<0.000000e+00> : vector<16x256xf32>
    %71 = tpu.matmul %69, %70, %cst_41 {dimension_numbers = #tpu.dot_dimension_numbers<[1], [0], [0], [1], [0, 0, 1, 1], [], []>} : vector<16x72xf32>, vector<72x256xf32>, vector<16x256xf32> -> vector<16x256xf32>
    %72 = vector.broadcast %27 : vector<16x1xf32> to vector<16x256xf32>
    %73 = arith.addf %71, %72 : vector<16x256xf32>
    %cst_42 = arith.constant 0.000000e+00 : f32
    %74 = vector.broadcast %cst_42 : f32 to vector<16x256xf32>
    %75 = arith.maximumf %73, %74 : vector<16x256xf32>
    %cst_43 = arith.constant dense<0.000000e+00> : vector<16xf32>
    %76 = vector.multi_reduction <add>, %75, %cst_43 [1] : vector<16x256xf32> to vector<16xf32>
    %77 = vector.shape_cast %76 : vector<16xf32> to vector<16x1xf32>
    %78 = arith.addf %28, %77 : vector<16x1xf32>
    %79 = arith.mulf %75, %75 : vector<16x256xf32>
    %cst_44 = arith.constant dense<0.000000e+00> : vector<16xf32>
    %80 = vector.multi_reduction <add>, %79, %cst_44 [1] : vector<16x256xf32> to vector<16xf32>
    %81 = vector.shape_cast %80 : vector<16xf32> to vector<16x1xf32>
    %82 = arith.addf %29, %81 : vector<16x1xf32>
    %c1 = arith.constant 1 : index
    %c0_45 = arith.constant 0 : index
    %c111_46 = arith.constant 111 : index
    %83 = vector.load %arg0[%c1, %c0_45, %c111_46] : memref<2x8x512xf32, #tpu.memory_space<vmem>>, vector<1x8x256xf32>
    %84 = vector.shape_cast %83 : vector<1x8x256xf32> to vector<8x256xf32>
    %85 = vector.broadcast %20 : vector<1x256xf32> to vector<8x256xf32>
    %86 = arith.mulf %84, %85 : vector<8x256xf32>
    %c0_47 = arith.constant 0 : index
    %c0_48 = arith.constant 0 : index
    %87 = vector.load %arg5[%c0_47, %c0_48] : memref<144x256xf32, #tpu.memory_space<vmem>>, vector<8x256xf32>
    tpu.vector_store %arg5[%c0_47, %c0_48], %86 {strides = array<i32>} : memref<144x256xf32, #tpu.memory_space<vmem>>, vector<8x256xf32>,
    %c1_49 = arith.constant 1 : index
    %c0_50 = arith.constant 0 : index
    %c112_51 = arith.constant 112 : index
    %88 = vector.load %arg0[%c1_49, %c0_50, %c112_51] : memref<2x8x512xf32, #tpu.memory_space<vmem>>, vector<1x8x256xf32>
    %89 = vector.shape_cast %88 : vector<1x8x256xf32> to vector<8x256xf32>
    %c8_52 = arith.constant 8 : index
    %c0_53 = arith.constant 0 : index
    %90 = vector.load %arg5[%c8_52, %c0_53] : memref<144x256xf32, #tpu.memory_space<vmem>>, vector<8x256xf32>
    tpu.vector_store %arg5[%c8_52, %c0_53], %89 {strides = array<i32>} : memref<144x256xf32, #tpu.memory_space<vmem>>, vector<8x256xf32>,
    %c1_54 = arith.constant 1 : index
    %c0_55 = arith.constant 0 : index
    %c113_56 = arith.constant 113 : index
    %91 = vector.load %arg0[%c1_54, %c0_55, %c113_56] : memref<2x8x512xf32, #tpu.memory_space<vmem>>, vector<1x8x256xf32>
    %92 = vector.shape_cast %91 : vector<1x8x256xf32> to vector<8x256xf32>
    %93 = vector.broadcast %24 : vector<1x256xf32> to vector<8x256xf32>
    %94 = arith.mulf %92, %93 : vector<8x256xf32>
    %c16_57 = arith.constant 16 : index
    %c0_58 = arith.constant 0 : index
    %95 = vector.load %arg5[%c16_57, %c0_58] : memref<144x256xf32, #tpu.memory_space<vmem>>, vector<8x256xf32>
    tpu.vector_store %arg5[%c16_57, %c0_58], %94 {strides = array<i32>} : memref<144x256xf32, #tpu.memory_space<vmem>>, vector<8x256xf32>,
    %c1_59 = arith.constant 1 : index
    %c0_60 = arith.constant 0 : index
    %c127_61 = arith.constant 127 : index
    %96 = vector.load %arg0[%c1_59, %c0_60, %c127_61] : memref<2x8x512xf32, #tpu.memory_space<vmem>>, vector<1x8x256xf32>
    %97 = vector.shape_cast %96 : vector<1x8x256xf32> to vector<8x256xf32>
    %98 = vector.broadcast %20 : vector<1x256xf32> to vector<8x256xf32>
    %99 = arith.mulf %97, %98 : vector<8x256xf32>
    %c24_62 = arith.constant 24 : index
    %c0_63 = arith.constant 0 : index
    %100 = vector.load %arg5[%c24_62, %c0_63] : memref<144x256xf32, #tpu.memory_space<vmem>>, vector<8x256xf32>
    tpu.vector_store %arg5[%c24_62, %c0_63], %99 {strides = array<i32>} : memref<144x256xf32, #tpu.memory_space<vmem>>, vector<8x256xf32>,
    %c1_64 = arith.constant 1 : index
    %c0_65 = arith.constant 0 : index
    %c128_66 = arith.constant 128 : index
    %101 = vector.load %arg0[%c1_64, %c0_65, %c128_66] : memref<2x8x512xf32, #tpu.memory_space<vmem>>, vector<1x8x256xf32>
    %102 = vector.shape_cast %101 : vector<1x8x256xf32> to vector<8x256xf32>
    %c32_67 = arith.constant 32 : index
    %c0_68 = arith.constant 0 : index
    %103 = vector.load %arg5[%c32_67, %c0_68] : memref<144x256xf32, #tpu.memory_space<vmem>>, vector<8x256xf32>
    tpu.vector_store %arg5[%c32_67, %c0_68], %102 {strides = array<i32>} : memref<144x256xf32, #tpu.memory_space<vmem>>, vector<8x256xf32>,
    %c1_69 = arith.constant 1 : index
    %c0_70 = arith.constant 0 : index
    %c129_71 = arith.constant 129 : index
    %104 = vector.load %arg0[%c1_69, %c0_70, %c129_71] : memref<2x8x512xf32, #tpu.memory_space<vmem>>, vector<1x8x256xf32>
    %105 = vector.shape_cast %104 : vector<1x8x256xf32> to vector<8x256xf32>
    %106 = vector.broadcast %24 : vector<1x256xf32> to vector<8x256xf32>
    %107 = arith.mulf %105, %106 : vector<8x256xf32>
    %c40_72 = arith.constant 40 : index
    %c0_73 = arith.constant 0 : index
    %108 = vector.load %arg5[%c40_72, %c0_73] : memref<144x256xf32, #tpu.memory_space<vmem>>, vector<8x256xf32>
    tpu.vector_store %arg5[%c40_72, %c0_73], %107 {strides = array<i32>} : memref<144x256xf32, #tpu.memory_space<vmem>>, vector<8x256xf32>,
    %c1_74 = arith.constant 1 : index
    %c0_75 = arith.constant 0 : index
    %c143_76 = arith.constant 143 : index
    %109 = vector.load %arg0[%c1_74, %c0_75, %c143_76] : memref<2x8x512xf32, #tpu.memory_space<vmem>>, vector<1x8x256xf32>
    %110 = vector.shape_cast %109 : vector<1x8x256xf32> to vector<8x256xf32>
    %111 = vector.broadcast %20 : vector<1x256xf32> to vector<8x256xf32>
    %112 = arith.mulf %110, %111 : vector<8x256xf32>
    %c48_77 = arith.constant 48 : index
    %c0_78 = arith.constant 0 : index
    %113 = vector.load %arg5[%c48_77, %c0_78] : memref<144x256xf32, #tpu.memory_space<vmem>>, vector<8x256xf32>
    tpu.vector_store %arg5[%c48_77, %c0_78], %112 {strides = array<i32>} : memref<144x256xf32, #tpu.memory_space<vmem>>, vector<8x256xf32>,
    %c1_79 = arith.constant 1 : index
    %c0_80 = arith.constant 0 : index
    %c144_81 = arith.constant 144 : index
    %114 = vector.load %arg0[%c1_79, %c0_80, %c144_81] : memref<2x8x512xf32, #tpu.memory_space<vmem>>, vector<1x8x256xf32>
    %115 = vector.shape_cast %114 : vector<1x8x256xf32> to vector<8x256xf32>
    %c56_82 = arith.constant 56 : index
    %c0_83 = arith.constant 0 : index
    %116 = vector.load %arg5[%c56_82, %c0_83] : memref<144x256xf32, #tpu.memory_space<vmem>>, vector<8x256xf32>
    tpu.vector_store %arg5[%c56_82, %c0_83], %115 {strides = array<i32>} : memref<144x256xf32, #tpu.memory_space<vmem>>, vector<8x256xf32>,
    %c1_84 = arith.constant 1 : index
    %c0_85 = arith.constant 0 : index
    %c145_86 = arith.constant 145 : index
    %117 = vector.load %arg0[%c1_84, %c0_85, %c145_86] : memref<2x8x512xf32, #tpu.memory_space<vmem>>, vector<1x8x256xf32>
    %118 = vector.shape_cast %117 : vector<1x8x256xf32> to vector<8x256xf32>
    %119 = vector.broadcast %24 : vector<1x256xf32> to vector<8x256xf32>
    %120 = arith.mulf %118, %119 : vector<8x256xf32>
    %c64_87 = arith.constant 64 : index
    %c0_88 = arith.constant 0 : index
    %121 = vector.load %arg5[%c64_87, %c0_88] : memref<144x256xf32, #tpu.memory_space<vmem>>, vector<8x256xf32>
    tpu.vector_store %arg5[%c64_87, %c0_88], %120 {strides = array<i32>} : memref<144x256xf32, #tpu.memory_space<vmem>>, vector<8x256xf32>,
    %c0_89 = arith.constant 0 : index
    %c0_90 = arith.constant 0 : index
    %122 = vector.load %arg1[%c0_89, %c0_90] : memref<16x72xf32, #tpu.memory_space<vmem>>, vector<16x72xf32>
    %c0_91 = arith.constant 0 : index
    %c0_92 = arith.constant 0 : index
    %123 = vector.load %arg5[%c0_91, %c0_92] : memref<144x256xf32, #tpu.memory_space<vmem>>, vector<72x256xf32>
    %cst_93 = arith.constant dense<0.000000e+00> : vector<16x256xf32>
    %124 = tpu.matmul %122, %123, %cst_93 {dimension_numbers = #tpu.dot_dimension_numbers<[1], [0], [0], [1], [0, 0, 1, 1], [], []>} : vector<16x72xf32>, vector<72x256xf32>, vector<16x256xf32> -> vector<16x256xf32>
    %125 = vector.broadcast %27 : vector<16x1xf32> to vector<16x256xf32>
    %126 = arith.addf %124, %125 : vector<16x256xf32>
    %cst_94 = arith.constant 0.000000e+00 : f32
    %127 = vector.broadcast %cst_94 : f32 to vector<16x256xf32>
    %128 = arith.maximumf %126, %127 : vector<16x256xf32>
    %cst_95 = arith.constant dense<0.000000e+00> : vector<16xf32>
    %129 = vector.multi_reduction <add>, %128, %cst_95 [1] : vector<16x256xf32> to vector<16xf32>
    %130 = vector.shape_cast %129 : vector<16xf32> to vector<16x1xf32>
    %131 = arith.addf %78, %130 : vector<16x1xf32>
    %132 = arith.mulf %128, %128 : vector<16x256xf32>
    %cst_96 = arith.constant dense<0.000000e+00> : vector<16xf32>
    %133 = vector.multi_reduction <add>, %132, %cst_96 [1] : vector<16x256xf32> to vector<16xf32>
    %134 = vector.shape_cast %133 : vector<16xf32> to vector<16x1xf32>
    %135 = arith.addf %82, %134 : vector<16x1xf32>
    %cst_97 = arith.constant 5.120000e+02 : f32
    %136 = vector.broadcast %cst_97 : f32 to vector<16x1xf32>
    %137 = arith.divf %131, %136 : vector<16x1xf32>
    %cst_98 = arith.constant 5.120000e+02 : f32
    %138 = vector.broadcast %cst_98 : f32 to vector<16x1xf32>
    %139 = arith.divf %135, %138 : vector<16x1xf32>
    %140 = arith.mulf %137, %137 : vector<16x1xf32>
    %141 = arith.subf %139, %140 : vector<16x1xf32>
    %cst_99 = arith.constant 9.99999974E-6 : f32
    %142 = vector.broadcast %cst_99 : f32 to vector<16x1xf32>
    %143 = arith.addf %141, %142 : vector<16x1xf32>
    %144 = math.rsqrt %143 : vector<16x1xf32>
    %c0_100 = arith.constant 0 : index
    %c1_101 = arith.constant 1 : index
    %145 = vector.load %arg3[%c0_100, %c1_101] : memref<16x4xf32, #tpu.memory_space<vmem>>, vector<16x1xf32>
    %146 = arith.mulf %145, %144 : vector<16x1xf32>
    %c0_102 = arith.constant 0 : index
    %c2 = arith.constant 2 : index
    %147 = vector.load %arg3[%c0_102, %c2] : memref<16x4xf32, #tpu.memory_space<vmem>>, vector<16x1xf32>
    %148 = arith.mulf %137, %146 : vector<16x1xf32>
    %149 = arith.subf %147, %148 : vector<16x1xf32>
    %c0_103 = arith.constant 0 : index
    %c3 = arith.constant 3 : index
    %150 = vector.load %arg3[%c0_103, %c3] : memref<16x4xf32, #tpu.memory_space<vmem>>, vector<4x1xf32>
    %151 = vector.broadcast %146 : vector<16x1xf32> to vector<16x256xf32>
    %152 = arith.mulf %75, %151 : vector<16x256xf32>
    %153 = vector.broadcast %149 : vector<16x1xf32> to vector<16x256xf32>
    %154 = arith.addf %152, %153 : vector<16x256xf32>
    %c0_104 = arith.constant 0 : index
    %c128_105 = arith.constant 128 : index
    %155 = vector.load %arg6[%c0_104, %c128_105] : memref<16x512xf32, #tpu.memory_space<vmem>>, vector<16x256xf32>
    tpu.vector_store %arg6[%c0_104, %c128_105], %154 {strides = array<i32>} : memref<16x512xf32, #tpu.memory_space<vmem>>, vector<16x256xf32>,
    %c0_106 = arith.constant 0 : index
    %c111_107 = arith.constant 111 : index
    %156 = vector.load %arg6[%c0_106, %c111_107] : memref<16x512xf32, #tpu.memory_space<vmem>>, vector<16x256xf32>
    %157 = vector.broadcast %20 : vector<1x256xf32> to vector<16x256xf32>
    %158 = arith.mulf %156, %157 : vector<16x256xf32>
    %c0_108 = arith.constant 0 : index
    %c0_109 = arith.constant 0 : index
    %159 = vector.load %arg5[%c0_108, %c0_109] : memref<144x256xf32, #tpu.memory_space<vmem>>, vector<16x256xf32>
    tpu.vector_store %arg5[%c0_108, %c0_109], %158 {strides = array<i32>} : memref<144x256xf32, #tpu.memory_space<vmem>>, vector<16x256xf32>,
    %c0_110 = arith.constant 0 : index
    %c112_111 = arith.constant 112 : index
    %160 = vector.load %arg6[%c0_110, %c112_111] : memref<16x512xf32, #tpu.memory_space<vmem>>, vector<16x256xf32>
    %c16_112 = arith.constant 16 : index
    %c0_113 = arith.constant 0 : index
    %161 = vector.load %arg5[%c16_112, %c0_113] : memref<144x256xf32, #tpu.memory_space<vmem>>, vector<16x256xf32>
    tpu.vector_store %arg5[%c16_112, %c0_113], %160 {strides = array<i32>} : memref<144x256xf32, #tpu.memory_space<vmem>>, vector<16x256xf32>,
    %c0_114 = arith.constant 0 : index
    %c113_115 = arith.constant 113 : index
    %162 = vector.load %arg6[%c0_114, %c113_115] : memref<16x512xf32, #tpu.memory_space<vmem>>, vector<16x256xf32>
    %163 = vector.broadcast %24 : vector<1x256xf32> to vector<16x256xf32>
    %164 = arith.mulf %162, %163 : vector<16x256xf32>
    %c32_116 = arith.constant 32 : index
    %c0_117 = arith.constant 0 : index
    %165 = vector.load %arg5[%c32_116, %c0_117] : memref<144x256xf32, #tpu.memory_space<vmem>>, vector<16x256xf32>
    tpu.vector_store %arg5[%c32_116, %c0_117], %164 {strides = array<i32>} : memref<144x256xf32, #tpu.memory_space<vmem>>, vector<16x256xf32>,
    %c0_118 = arith.constant 0 : index
    %c127_119 = arith.constant 127 : index
    %166 = vector.load %arg6[%c0_118, %c127_119] : memref<16x512xf32, #tpu.memory_space<vmem>>, vector<16x256xf32>
    %167 = vector.broadcast %20 : vector<1x256xf32> to vector<16x256xf32>
    %168 = arith.mulf %166, %167 : vector<16x256xf32>
    %c48_120 = arith.constant 48 : index
    %c0_121 = arith.constant 0 : index
    %169 = vector.load %arg5[%c48_120, %c0_121] : memref<144x256xf32, #tpu.memory_space<vmem>>, vector<16x256xf32>
    tpu.vector_store %arg5[%c48_120, %c0_121], %168 {strides = array<i32>} : memref<144x256xf32, #tpu.memory_space<vmem>>, vector<16x256xf32>,
    %c0_122 = arith.constant 0 : index
    %c128_123 = arith.constant 128 : index
    %170 = vector.load %arg6[%c0_122, %c128_123] : memref<16x512xf32, #tpu.memory_space<vmem>>, vector<16x256xf32>
    %c64_124 = arith.constant 64 : index
    %c0_125 = arith.constant 0 : index
    %171 = vector.load %arg5[%c64_124, %c0_125] : memref<144x256xf32, #tpu.memory_space<vmem>>, vector<16x256xf32>
    tpu.vector_store %arg5[%c64_124, %c0_125], %170 {strides = array<i32>} : memref<144x256xf32, #tpu.memory_space<vmem>>, vector<16x256xf32>,
    %c0_126 = arith.constant 0 : index
    %c129_127 = arith.constant 129 : index
    %172 = vector.load %arg6[%c0_126, %c129_127] : memref<16x512xf32, #tpu.memory_space<vmem>>, vector<16x256xf32>
    %173 = vector.broadcast %24 : vector<1x256xf32> to vector<16x256xf32>
    %174 = arith.mulf %172, %173 : vector<16x256xf32>
    %c80 = arith.constant 80 : index
    %c0_128 = arith.constant 0 : index
    %175 = vector.load %arg5[%c80, %c0_128] : memref<144x256xf32, #tpu.memory_space<vmem>>, vector<16x256xf32>
    tpu.vector_store %arg5[%c80, %c0_128], %174 {strides = array<i32>} : memref<144x256xf32, #tpu.memory_space<vmem>>, vector<16x256xf32>,
    %c0_129 = arith.constant 0 : index
    %c143_130 = arith.constant 143 : index
    %176 = vector.load %arg6[%c0_129, %c143_130] : memref<16x512xf32, #tpu.memory_space<vmem>>, vector<16x256xf32>
    %177 = vector.broadcast %20 : vector<1x256xf32> to vector<16x256xf32>
    %178 = arith.mulf %176, %177 : vector<16x256xf32>
    %c96 = arith.constant 96 : index
    %c0_131 = arith.constant 0 : index
    %179 = vector.load %arg5[%c96, %c0_131] : memref<144x256xf32, #tpu.memory_space<vmem>>, vector<16x256xf32>
    tpu.vector_store %arg5[%c96, %c0_131], %178 {strides = array<i32>} : memref<144x256xf32, #tpu.memory_space<vmem>>, vector<16x256xf32>,
    %c0_132 = arith.constant 0 : index
    %c144_133 = arith.constant 144 : index
    %180 = vector.load %arg6[%c0_132, %c144_133] : memref<16x512xf32, #tpu.memory_space<vmem>>, vector<16x256xf32>
    %c112_134 = arith.constant 112 : index
    %c0_135 = arith.constant 0 : index
    %181 = vector.load %arg5[%c112_134, %c0_135] : memref<144x256xf32, #tpu.memory_space<vmem>>, vector<16x256xf32>
    tpu.vector_store %arg5[%c112_134, %c0_135], %180 {strides = array<i32>} : memref<144x256xf32, #tpu.memory_space<vmem>>, vector<16x256xf32>,
    %c0_136 = arith.constant 0 : index
    %c145_137 = arith.constant 145 : index
    %182 = vector.load %arg6[%c0_136, %c145_137] : memref<16x512xf32, #tpu.memory_space<vmem>>, vector<16x256xf32>
    %183 = vector.broadcast %24 : vector<1x256xf32> to vector<16x256xf32>
    %184 = arith.mulf %182, %183 : vector<16x256xf32>
    %c128_138 = arith.constant 128 : index
    %c0_139 = arith.constant 0 : index
    %185 = vector.load %arg5[%c128_138, %c0_139] : memref<144x256xf32, #tpu.memory_space<vmem>>, vector<16x256xf32>
    tpu.vector_store %arg5[%c128_138, %c0_139], %184 {strides = array<i32>} : memref<144x256xf32, #tpu.memory_space<vmem>>, vector<16x256xf32>,
    %c0_140 = arith.constant 0 : index
    %c0_141 = arith.constant 0 : index
    %186 = vector.load %arg2[%c0_140, %c0_141] : memref<4x144xf32, #tpu.memory_space<vmem>>, vector<4x144xf32>
    %c0_142 = arith.constant 0 : index
    %c0_143 = arith.constant 0 : index
    %187 = vector.load %arg5[%c0_142, %c0_143] : memref<144x256xf32, #tpu.memory_space<vmem>>, vector<144x256xf32>
    %cst_144 = arith.constant dense<0.000000e+00> : vector<4x256xf32>
    %188 = tpu.matmul %186, %187, %cst_144 {dimension_numbers = #tpu.dot_dimension_numbers<[1], [0], [0], [1], [0, 0, 1, 1], [], []>} : vector<4x144xf32>, vector<144x256xf32>, vector<4x256xf32> -> vector<4x256xf32>
    %189 = vector.broadcast %150 : vector<4x1xf32> to vector<4x256xf32>
    %190 = arith.addf %188, %189 : vector<4x256xf32>
    %c0_145 = arith.constant 0 : index
    %c0_146 = arith.constant 0 : index
    %c0_147 = arith.constant 0 : index
    %191 = vector.load %arg4[%c0_145, %c0_146, %c0_147] : memref<2x4x256xf32, #tpu.memory_space<vmem>>, vector<1x4x256xf32>
    %192 = vector.shape_cast %191 : vector<1x4x256xf32> to vector<4x256xf32>
    %193 = vector.shape_cast %190 : vector<4x256xf32> to vector<1x4x256xf32>
    tpu.vector_store %arg4[%c0_145, %c0_146, %c0_147], %193 {strides = array<i32>} : memref<2x4x256xf32, #tpu.memory_space<vmem>>, vector<1x4x256xf32>,
    %194 = vector.broadcast %146 : vector<16x1xf32> to vector<16x256xf32>
    %195 = arith.mulf %128, %194 : vector<16x256xf32>
    %196 = vector.broadcast %149 : vector<16x1xf32> to vector<16x256xf32>
    %197 = arith.addf %195, %196 : vector<16x256xf32>
    %c0_148 = arith.constant 0 : index
    %c128_149 = arith.constant 128 : index
    %198 = vector.load %arg6[%c0_148, %c128_149] : memref<16x512xf32, #tpu.memory_space<vmem>>, vector<16x256xf32>
    tpu.vector_store %arg6[%c0_148, %c128_149], %197 {strides = array<i32>} : memref<16x512xf32, #tpu.memory_space<vmem>>, vector<16x256xf32>,
    %c0_150 = arith.constant 0 : index
    %c111_151 = arith.constant 111 : index
    %199 = vector.load %arg6[%c0_150, %c111_151] : memref<16x512xf32, #tpu.memory_space<vmem>>, vector<16x256xf32>
    %200 = vector.broadcast %20 : vector<1x256xf32> to vector<16x256xf32>
    %201 = arith.mulf %199, %200 : vector<16x256xf32>
    %c0_152 = arith.constant 0 : index
    %c0_153 = arith.constant 0 : index
    %202 = vector.load %arg5[%c0_152, %c0_153] : memref<144x256xf32, #tpu.memory_space<vmem>>, vector<16x256xf32>
    tpu.vector_store %arg5[%c0_152, %c0_153], %201 {strides = array<i32>} : memref<144x256xf32, #tpu.memory_space<vmem>>, vector<16x256xf32>,
    %c0_154 = arith.constant 0 : index
    %c112_155 = arith.constant 112 : index
    %203 = vector.load %arg6[%c0_154, %c112_155] : memref<16x512xf32, #tpu.memory_space<vmem>>, vector<16x256xf32>
    %c16_156 = arith.constant 16 : index
    %c0_157 = arith.constant 0 : index
    %204 = vector.load %arg5[%c16_156, %c0_157] : memref<144x256xf32, #tpu.memory_space<vmem>>, vector<16x256xf32>
    tpu.vector_store %arg5[%c16_156, %c0_157], %203 {strides = array<i32>} : memref<144x256xf32, #tpu.memory_space<vmem>>, vector<16x256xf32>,
    %c0_158 = arith.constant 0 : index
    %c113_159 = arith.constant 113 : index
    %205 = vector.load %arg6[%c0_158, %c113_159] : memref<16x512xf32, #tpu.memory_space<vmem>>, vector<16x256xf32>
    %206 = vector.broadcast %24 : vector<1x256xf32> to vector<16x256xf32>
    %207 = arith.mulf %205, %206 : vector<16x256xf32>
    %c32_160 = arith.constant 32 : index
    %c0_161 = arith.constant 0 : index
    %208 = vector.load %arg5[%c32_160, %c0_161] : memref<144x256xf32, #tpu.memory_space<vmem>>, vector<16x256xf32>
    tpu.vector_store %arg5[%c32_160, %c0_161], %207 {strides = array<i32>} : memref<144x256xf32, #tpu.memory_space<vmem>>, vector<16x256xf32>,
    %c0_162 = arith.constant 0 : index
    %c127_163 = arith.constant 127 : index
    %209 = vector.load %arg6[%c0_162, %c127_163] : memref<16x512xf32, #tpu.memory_space<vmem>>, vector<16x256xf32>
    %210 = vector.broadcast %20 : vector<1x256xf32> to vector<16x256xf32>
    %211 = arith.mulf %209, %210 : vector<16x256xf32>
    %c48_164 = arith.constant 48 : index
    %c0_165 = arith.constant 0 : index
    %212 = vector.load %arg5[%c48_164, %c0_165] : memref<144x256xf32, #tpu.memory_space<vmem>>, vector<16x256xf32>
    tpu.vector_store %arg5[%c48_164, %c0_165], %211 {strides = array<i32>} : memref<144x256xf32, #tpu.memory_space<vmem>>, vector<16x256xf32>,
    %c0_166 = arith.constant 0 : index
    %c128_167 = arith.constant 128 : index
    %213 = vector.load %arg6[%c0_166, %c128_167] : memref<16x512xf32, #tpu.memory_space<vmem>>, vector<16x256xf32>
    %c64_168 = arith.constant 64 : index
    %c0_169 = arith.constant 0 : index
    %214 = vector.load %arg5[%c64_168, %c0_169] : memref<144x256xf32, #tpu.memory_space<vmem>>, vector<16x256xf32>
    tpu.vector_store %arg5[%c64_168, %c0_169], %213 {strides = array<i32>} : memref<144x256xf32, #tpu.memory_space<vmem>>, vector<16x256xf32>,
    %c0_170 = arith.constant 0 : index
    %c129_171 = arith.constant 129 : index
    %215 = vector.load %arg6[%c0_170, %c129_171] : memref<16x512xf32, #tpu.memory_space<vmem>>, vector<16x256xf32>
    %216 = vector.broadcast %24 : vector<1x256xf32> to vector<16x256xf32>
    %217 = arith.mulf %215, %216 : vector<16x256xf32>
    %c80_172 = arith.constant 80 : index
    %c0_173 = arith.constant 0 : index
    %218 = vector.load %arg5[%c80_172, %c0_173] : memref<144x256xf32, #tpu.memory_space<vmem>>, vector<16x256xf32>
    tpu.vector_store %arg5[%c80_172, %c0_173], %217 {strides = array<i32>} : memref<144x256xf32, #tpu.memory_space<vmem>>, vector<16x256xf32>,
    %c0_174 = arith.constant 0 : index
    %c143_175 = arith.constant 143 : index
    %219 = vector.load %arg6[%c0_174, %c143_175] : memref<16x512xf32, #tpu.memory_space<vmem>>, vector<16x256xf32>
    %220 = vector.broadcast %20 : vector<1x256xf32> to vector<16x256xf32>
    %221 = arith.mulf %219, %220 : vector<16x256xf32>
    %c96_176 = arith.constant 96 : index
    %c0_177 = arith.constant 0 : index
    %222 = vector.load %arg5[%c96_176, %c0_177] : memref<144x256xf32, #tpu.memory_space<vmem>>, vector<16x256xf32>
    tpu.vector_store %arg5[%c96_176, %c0_177], %221 {strides = array<i32>} : memref<144x256xf32, #tpu.memory_space<vmem>>, vector<16x256xf32>,
    %c0_178 = arith.constant 0 : index
    %c144_179 = arith.constant 144 : index
    %223 = vector.load %arg6[%c0_178, %c144_179] : memref<16x512xf32, #tpu.memory_space<vmem>>, vector<16x256xf32>
    %c112_180 = arith.constant 112 : index
    %c0_181 = arith.constant 0 : index
    %224 = vector.load %arg5[%c112_180, %c0_181] : memref<144x256xf32, #tpu.memory_space<vmem>>, vector<16x256xf32>
    tpu.vector_store %arg5[%c112_180, %c0_181], %223 {strides = array<i32>} : memref<144x256xf32, #tpu.memory_space<vmem>>, vector<16x256xf32>,
    %c0_182 = arith.constant 0 : index
    %c145_183 = arith.constant 145 : index
    %225 = vector.load %arg6[%c0_182, %c145_183] : memref<16x512xf32, #tpu.memory_space<vmem>>, vector<16x256xf32>
    %226 = vector.broadcast %24 : vector<1x256xf32> to vector<16x256xf32>
    %227 = arith.mulf %225, %226 : vector<16x256xf32>
    %c128_184 = arith.constant 128 : index
    %c0_185 = arith.constant 0 : index
    %228 = vector.load %arg5[%c128_184, %c0_185] : memref<144x256xf32, #tpu.memory_space<vmem>>, vector<16x256xf32>
    tpu.vector_store %arg5[%c128_184, %c0_185], %227 {strides = array<i32>} : memref<144x256xf32, #tpu.memory_space<vmem>>, vector<16x256xf32>,
    %c0_186 = arith.constant 0 : index
    %c0_187 = arith.constant 0 : index
    %229 = vector.load %arg2[%c0_186, %c0_187] : memref<4x144xf32, #tpu.memory_space<vmem>>, vector<4x144xf32>
    %c0_188 = arith.constant 0 : index
    %c0_189 = arith.constant 0 : index
    %230 = vector.load %arg5[%c0_188, %c0_189] : memref<144x256xf32, #tpu.memory_space<vmem>>, vector<144x256xf32>
    %cst_190 = arith.constant dense<0.000000e+00> : vector<4x256xf32>
    %231 = tpu.matmul %229, %230, %cst_190 {dimension_numbers = #tpu.dot_dimension_numbers<[1], [0], [0], [1], [0, 0, 1, 1], [], []>} : vector<4x144xf32>, vector<144x256xf32>, vector<4x256xf32> -> vector<4x256xf32>
    %232 = vector.broadcast %150 : vector<4x1xf32> to vector<4x256xf32>
    %233 = arith.addf %231, %232 : vector<4x256xf32>
    %c1_191 = arith.constant 1 : index
    %c0_192 = arith.constant 0 : index
    %c0_193 = arith.constant 0 : index
    %234 = vector.load %arg4[%c1_191, %c0_192, %c0_193] : memref<2x4x256xf32, #tpu.memory_space<vmem>>, vector<1x4x256xf32>
    %235 = vector.shape_cast %234 : vector<1x4x256xf32> to vector<4x256xf32>
    %236 = vector.shape_cast %233 : vector<4x256xf32> to vector<1x4x256xf32>
    tpu.vector_store %arg4[%c1_191, %c0_192, %c0_193], %236 {strides = array<i32>} : memref<2x4x256xf32, #tpu.memory_space<vmem>>, vector<1x4x256xf32>,
    return
  }
}

</mosaic_0001>

<llo_original>
// kernel: model_forward.1
$region0: #{model_forward.1}
  #allocation0 [shape = 'u32[]', space=smem, size = 0x4, offset = 0x4, fixed_abs, tag = 'smem constant byte address 0x4 - core index']
  #allocation1 [shape = 'u32[144,128]{1,0:T(1,128)}', space=vmem, size = 0x12000, scoped, tag = 'internal scratch']
  #allocation2 [shape = 'f32[144,256]{1,0:T(8,128)}', space=vmem, size = 0x24000, scoped, tag = 'scratch operand']
  #allocation3 [shape = 'f32[16,512]{1,0:T(8,128)}', space=vmem, size = 0x8000, scoped, tag = 'scratch operand']
  %s0 = inlined_call_operand.vmem [shape: f32[2,8,512], index: 0, kind: input, shape index: {}]
  %s1 = inlined_call_operand.vmem [shape: f32[16,72], index: 1, kind: input, shape index: {}]
  %s2 = inlined_call_operand.vmem [shape: f32[4,144], index: 2, kind: input, shape index: {}]
  %s3 = inlined_call_operand.vmem [shape: f32[16,4], index: 3, kind: input, shape index: {}]
  %s4 = inlined_call_operand.vmem [shape: f32[2,4,256], index: 4, kind: output, shape index: {}]
  %s5 = sld [smem:[#allocation0]]
  $region26: #{model_forward.1} parent=0
    _
  %s7 = ssub.s32 1, %s5
  %s8 = scalar_select 0, %s7, %s5
  // Predicated region
  $region2: #{model_forward.1} parent=0 // pred_check
    _
  $region3: #{model_forward.1} parent=0 // pred_check_branch
    %10 = sbr.rel (0) target = $region5
  $region4: #{model_forward.1} parent=0 // pred_region
    _
  $region5: #{model_forward.1} parent=0 // pred_fallthru
    _
  // Predicated region
  $region6: #{model_forward.1} parent=0 // pred_check
    _
  $region7: #{model_forward.1} parent=0 // pred_check_branch
    %12 = sbr.rel (0) target = $region9
  $region8: #{model_forward.1} parent=0 // pred_region
    _
  $region9: #{model_forward.1} parent=0 // pred_fallthru
    _
  // Predicated region
  $region10: #{model_forward.1} parent=0 // pred_check
    _
  $region11: #{model_forward.1} parent=0 // pred_check_branch
    %14 = sbr.rel (0) target = $region13
  $region12: #{model_forward.1} parent=0 // pred_region
    _
  $region13: #{model_forward.1} parent=0 // pred_fallthru
    _
  // Predicated region
  $region14: #{model_forward.1} parent=0 // pred_check
    _
  $region15: #{model_forward.1} parent=0 // pred_check_branch
    %16 = sbr.rel (0) target = $region17
  $region16: #{model_forward.1} parent=0 // pred_region
    _
  $region17: #{model_forward.1} parent=0 // pred_fallthru
    _
  %v17 = vlaneseq
  %v18 = vand.u32 %v17, 127
  %v19 = vadd.s32 %v18, 128
  %vm20 = vcmp.lt.s32.totalorder %v18, 0
  %v21 = vsub.s32 0, %v18
  %v22 = vsel %vm20, %v21, %v18
  %v23 = vshrl.u32 %v22, 4
  %v24 = vand.u32 %v22, 15
  %v25 = vsub.s32 0, %v24
  %v26 = vsel %vm20, %v25, %v24
  %vm27 = vcmp.lt.s32.totalorder %v19, 0
  %v28 = vsub.s32 0, %v19
  %v29 = vsel %vm27, %v28, %v19
  %v30 = vshrl.u32 %v29, 4
  %v31 = vand.u32 %v29, 15
  %v32 = vsub.s32 0, %v31
  %v33 = vsel %vm27, %v32, %v31
  %vm34 = vcmp.ne.s32.totalorder %v26, 0
  %vm35 = vcmp.ne.s32.totalorder %v33, 0
  %vm36 = vcmp.lt.s32.totalorder %v26, 0
  %vm37 = vcmp.lt.s32.totalorder %v33, 0
  %vm38 = vmand %vm36, %vm34
  %vm39 = vmand %vm37, %vm35
  %v40 = vadd.s32 %v26, 16
  %v41 = vadd.s32 %v33, 16
  %v42 = vsel %vm38, %v40, %v26
  %v43 = vsel %vm39, %v41, %v33
  %vm44 = vcmp.ge.s32.totalorder %v42, 1
  %vm45 = vcmp.ge.s32.totalorder %v43, 1
  %v46 = vsel %vm44, 1, 0
  %v47 = vsel %vm45, 1, 0
  %v48 = vcvt.s32.f32 %v46
  %v49 = vcvt.s32.f32 %v47
  %vm50 = vcmp.lt.s32.totalorder %v42, 15
  %vm51 = vcmp.lt.s32.totalorder %v43, 15
  %v52 = vsel %vm50, 1, 0
  %v53 = vsel %vm51, 1, 0
  %v54 = vcvt.s32.f32 %v52
  %v55 = vcvt.s32.f32 %v53
  %56 = vst [vmem:[#allocation3] sm:$0xff] 0.0
  %57 = vst [vmem:[#allocation3 + $0x8] sm:$0xff] 0.0
  %58 = vst [vmem:[#allocation3 + $0x10] sm:$0xff] 0.0
  %59 = vst [vmem:[#allocation3 + $0x18] sm:$0xff] 0.0
  %60 = vst [vmem:[#allocation3 + $0x20] sm:$0xff] 0.0
  %61 = vst [vmem:[#allocation3 + $0x28] sm:$0xff] 0.0
  %62 = vst [vmem:[#allocation3 + $0x30] sm:$0xff] 0.0
  %63 = vst [vmem:[#allocation3 + $0x38] sm:$0xff] 0.0
  %v64 = vld [vmem:[%s3] sm:$0xff]
  %v65 = vld [vmem:[%s3 + $0x8] sm:$0xff]
  %v66 = vld [vmem:[%s0] sm:$0xff]
  %v67 = vld [vmem:[%s0 + $0x8] sm:$0xff]
  %v68 = vld [vmem:[%s0 + $0x10] sm:$0xff]
  %71 = vrot.lane.b32.xlu0 %v48, 111
  %v72 = vpop.permute.xlu0 %71
  %73 = vrot.lane.b32.xlu0 %v49, 111
  %v74 = vpop.permute.xlu0 %73
  %vm75 = vcmask 908288
  %v76 = vsel %vm75, %v72, %v74
  %v80 = vmul.f32 %v66, %v72
  %v81 = vmul.f32 %v67, %v76
  %v82 = vmul.f32 %v68, %v74
  %86 = vrot.lane.b32.xlu0 %v80, 17
  %v87 = vpop.permute.xlu0 %86
  %88 = vrot.lane.b32.xlu0 %v81, 17
  %v89 = vpop.permute.xlu0 %88
  %90 = vrot.lane.b32.xlu0 %v82, 17
  %v91 = vpop.permute.xlu0 %90
  %vm92 = vcmask 138240
  %v93 = vsel %vm92, %v87, %v89
  %v94 = vsel %vm92, %v89, %v91
  %97 = vst [vmem:[#allocation2] sm:$0xff] %v93
  %98 = vst [vmem:[#allocation2 + $0x8] sm:$0xff] %v94
  %v99 = vld [vmem:[%s0] sm:$0xff]
  %v100 = vld [vmem:[%s0 + $0x8] sm:$0xff]
  %v101 = vld [vmem:[%s0 + $0x10] sm:$0xff]
  %105 = vrot.lane.b32.xlu0 %v99, 16
  %v106 = vpop.permute.xlu0 %105
  %107 = vrot.lane.b32.xlu0 %v100, 16
  %v108 = vpop.permute.xlu0 %107
  %109 = vrot.lane.b32.xlu0 %v101, 16
  %v110 = vpop.permute.xlu0 %109
  %vm111 = vcmask 130048
  %v112 = vsel %vm111, %v106, %v108
  %v113 = vsel %vm111, %v108, %v110
  %116 = vst [vmem:[#allocation2 + $0x10] sm:$0xff] %v112
  %117 = vst [vmem:[#allocation2 + $0x18] sm:$0xff] %v113
  %v118 = vld [vmem:[%s0] sm:$0xff]
  %v119 = vld [vmem:[%s0 + $0x8] sm:$0xff]
  %v120 = vld [vmem:[%s0 + $0x10] sm:$0xff]
  %123 = vrot.lane.b32.xlu0 %v54, 113
  %v124 = vpop.permute.xlu0 %123
  %125 = vrot.lane.b32.xlu0 %v55, 113
  %v126 = vpop.permute.xlu0 %125
  %vm127 = vcmask 924672
  %v128 = vsel %vm127, %v124, %v126
  %v132 = vmul.f32 %v118, %v124
  %v133 = vmul.f32 %v119, %v128
  %v134 = vmul.f32 %v120, %v126
  %138 = vrot.lane.b32.xlu0 %v132, 15
  %v139 = vpop.permute.xlu0 %138
  %140 = vrot.lane.b32.xlu0 %v133, 15
  %v141 = vpop.permute.xlu0 %140
  %142 = vrot.lane.b32.xlu0 %v134, 15
  %v143 = vpop.permute.xlu0 %142
  %vm144 = vcmask 121856
  %v145 = vsel %vm144, %v139, %v141
  %v146 = vsel %vm144, %v141, %v143
  %149 = vst [vmem:[#allocation2 + $0x20] sm:$0xff] %v145
  %150 = vst [vmem:[#allocation2 + $0x28] sm:$0xff] %v146
  %v151 = vld [vmem:[%s0] sm:$0xff]
  %v152 = vld [vmem:[%s0 + $0x8] sm:$0xff]
  %v153 = vld [vmem:[%s0 + $0x10] sm:$0xff]
  %154 = vrot.lane.b32.xlu0 %v48, 127
  %v155 = vpop.permute.xlu0 %154
  %156 = vrot.lane.b32.xlu0 %v49, 127
  %v157 = vpop.permute.xlu0 %156
  %vm158 = vcmask 1039360
  %v159 = vsel %vm158, %v155, %v157
  %v163 = vmul.f32 %v151, %v155
  %v164 = vmul.f32 %v152, %v159
  %v165 = vmul.f32 %v153, %v157
  %169 = vrot.lane.b32.xlu0 %v163, 1
  %v170 = vpop.permute.xlu0 %169
  %171 = vrot.lane.b32.xlu0 %v164, 1
  %v172 = vpop.permute.xlu0 %171
  %173 = vrot.lane.b32.xlu0 %v165, 1
  %v174 = vpop.permute.xlu0 %173
  %vm175 = vcmask 7168
  %v176 = vsel %vm175, %v170, %v172
  %v177 = vsel %vm175, %v172, %v174
  %180 = vst [vmem:[#allocation2 + $0x30] sm:$0xff] %v176
  %181 = vst [vmem:[#allocation2 + $0x38] sm:$0xff] %v177
  %v182 = vld [vmem:[%s0 + $0x8] sm:$0xff]
  %v183 = vld [vmem:[%s0 + $0x10] sm:$0xff]
  %184 = vst [vmem:[#allocation2 + $0x40] sm:$0xff] %v182
  %185 = vst [vmem:[#allocation2 + $0x48] sm:$0xff] %v183
  %v186 = vld [vmem:[%s0 + $0x8] sm:$0xff]
  %v187 = vld [vmem:[%s0 + $0x10] sm:$0xff]
  %v188 = vld [vmem:[%s0 + $0x18] sm:$0xff]
  %189 = vrot.lane.b32.xlu0 %v54, 1
  %v190 = vpop.permute.xlu0 %189
  %191 = vrot.lane.b32.xlu0 %v55, 1
  %v192 = vpop.permute.xlu0 %191
  %v193 = vsel %vm175, %v190, %v192
  %v197 = vmul.f32 %v186, %v190
  %v198 = vmul.f32 %v187, %v193
  %v199 = vmul.f32 %v188, %v192
  %203 = vrot.lane.b32.xlu0 %v197, 127
  %v204 = vpop.permute.xlu0 %203
  %205 = vrot.lane.b32.xlu0 %v198, 127
  %v206 = vpop.permute.xlu0 %205
  %207 = vrot.lane.b32.xlu0 %v199, 127
  %v208 = vpop.permute.xlu0 %207
  %v209 = vsel %vm158, %v204, %v206
  %v210 = vsel %vm158, %v206, %v208
  %213 = vst [vmem:[#allocation2 + $0x50] sm:$0xff] %v209
  %214 = vst [vmem:[#allocation2 + $0x58] sm:$0xff] %v210
  %v215 = vld [vmem:[%s0 + $0x8] sm:$0xff]
  %v216 = vld [vmem:[%s0 + $0x10] sm:$0xff]
  %v217 = vld [vmem:[%s0 + $0x18] sm:$0xff]
  %218 = vrot.lane.b32.xlu0 %v48, 15
  %v219 = vpop.permute.xlu0 %218
  %220 = vrot.lane.b32.xlu0 %v49, 15
  %v221 = vpop.permute.xlu0 %220
  %v222 = vsel %vm144, %v219, %v221
  %v226 = vmul.f32 %v215, %v219
  %v227 = vmul.f32 %v216, %v222
  %v228 = vmul.f32 %v217, %v221
  %232 = vrot.lane.b32.xlu0 %v226, 113
  %v233 = vpop.permute.xlu0 %232
  %234 = vrot.lane.b32.xlu0 %v227, 113
  %v235 = vpop.permute.xlu0 %234
  %236 = vrot.lane.b32.xlu0 %v228, 113
  %v237 = vpop.permute.xlu0 %236
  %v238 = vsel %vm127, %v233, %v235
  %v239 = vsel %vm127, %v235, %v237
  %242 = vst [vmem:[#allocation2 + $0x60] sm:$0xff] %v238
  %243 = vst [vmem:[#allocation2 + $0x68] sm:$0xff] %v239
  %v244 = vld [vmem:[%s0 + $0x8] sm:$0xff]
  %v245 = vld [vmem:[%s0 + $0x10] sm:$0xff]
  %v246 = vld [vmem:[%s0 + $0x18] sm:$0xff]
  %250 = vrot.lane.b32.xlu0 %v244, 112
  %v251 = vpop.permute.xlu0 %250
  %252 = vrot.lane.b32.xlu0 %v245, 112
  %v253 = vpop.permute.xlu0 %252
  %254 = vrot.lane.b32.xlu0 %v246, 112
  %v255 = vpop.permute.xlu0 %254
  %vm256 = vcmask 916480
  %v257 = vsel %vm256, %v251, %v253
  %v258 = vsel %vm256, %v253, %v255
  %261 = vst [vmem:[#allocation2 + $0x70] sm:$0xff] %v257
  %262 = vst [vmem:[#allocation2 + $0x78] sm:$0xff] %v258
  %v263 = vld [vmem:[%s0 + $0x8] sm:$0xff]
  %v264 = vld [vmem:[%s0 + $0x10] sm:$0xff]
  %v265 = vld [vmem:[%s0 + $0x18] sm:$0xff]
  %266 = vrot.lane.b32.xlu0 %v54, 17
  %v267 = vpop.permute.xlu0 %266
  %268 = vrot.lane.b32.xlu0 %v55, 17
  %v269 = vpop.permute.xlu0 %268
  %v270 = vsel %vm92, %v267, %v269
  %v274 = vmul.f32 %v263, %v267
  %v275 = vmul.f32 %v264, %v270
  %v276 = vmul.f32 %v265, %v269
  %280 = vrot.lane.b32.xlu0 %v274, 111
  %v281 = vpop.permute.xlu0 %280
  %282 = vrot.lane.b32.xlu0 %v275, 111
  %v283 = vpop.permute.xlu0 %282
  %284 = vrot.lane.b32.xlu0 %v276, 111
  %v285 = vpop.permute.xlu0 %284
  %v286 = vsel %vm75, %v281, %v283
  %v287 = vsel %vm75, %v283, %v285
  %290 = vst [vmem:[#allocation2 + $0x80] sm:$0xff] %v286
  %291 = vst [vmem:[#allocation2 + $0x88] sm:$0xff] %v287
  %v292 = vld [vmem:[%s1] sm:$0xff]
  %v293 = vld [vmem:[%s1 + $0x8] sm:$0xff]
  %v294 = vld [vmem:[#allocation2] sm:$0xff]
  %v295 = vld [vmem:[#allocation2 + $0x8] sm:$0xff]
  %v296 = vld [vmem:[#allocation2 + $0x10] sm:$0xff]
  %v297 = vld [vmem:[#allocation2 + $0x18] sm:$0xff]
  %v298 = vld [vmem:[#allocation2 + $0x20] sm:$0xff]
  %v299 = vld [vmem:[#allocation2 + $0x28] sm:$0xff]
  %v300 = vld [vmem:[#allocation2 + $0x30] sm:$0xff]
  %v301 = vld [vmem:[#allocation2 + $0x38] sm:$0xff]
  %v302 = vld [vmem:[#allocation2 + $0x40] sm:$0xff]
  %v303 = vld [vmem:[#allocation2 + $0x48] sm:$0xff]
  %v304 = vld [vmem:[#allocation2 + $0x50] sm:$0xff]
  %v305 = vld [vmem:[#allocation2 + $0x58] sm:$0xff]
  %v306 = vld [vmem:[#allocation2 + $0x60] sm:$0xff]
  %v307 = vld [vmem:[#allocation2 + $0x68] sm:$0xff]
  %v308 = vld [vmem:[#allocation2 + $0x70] sm:$0xff]
  %v309 = vld [vmem:[#allocation2 + $0x78] sm:$0xff]
  %v310 = vld [vmem:[#allocation2 + $0x80] sm:$0xff]
  %v311 = vld [vmem:[#allocation2 + $0x88] sm:$0xff]
  %313 = vset.pattern.permute.xlu0 0
  %314 = vperm.xlu0 %313, %v64
  %v315 = vpop.permute.xlu0 %314
  %318 = vset.pattern.permute.xlu0 0
  %319 = vperm.xlu0 %318, %v65
  %v320 = vpop.permute.xlu0 %319
  %vm322 = vcmask 588800
  %v324 = vsel %vm322, %v292, 0
  %v327 = vsel %vm322, %v293, 0
  %329 = vmatprep.subr.mxu0 %v295
  %330 = vmatpush1.msra.mxu0 %v294
  %331 = vmatprep.subr.mxu0 %v297
  %332 = vmatpush1.msra.mxu0 %v296
  %333 = vmatprep.subr.mxu0 %v299
  %334 = vmatpush1.msra.mxu0 %v298
  %335 = vmatprep.subr.mxu0 %v301
  %336 = vmatpush1.msra.mxu0 %v300
  %337 = vmatprep.subr.mxu0 %v303
  %338 = vmatpush1.msra.mxu0 %v302
  %339 = vmatprep.subr.mxu0 %v305
  %340 = vmatpush1.msra.mxu0 %v304
  %341 = vmatprep.subr.mxu0 %v307
  %342 = vmatpush1.msra.mxu0 %v306
  %343 = vmatprep.subr.mxu0 %v309
  %344 = vmatpush1.msra.mxu0 %v308
  %345 = vmatprep.subr.mxu0 %v311
  %346 = vmatpush1.msra.mxu0 %v310
  %347 = vmatprep.subr.mxu0 0.0
  %348 = vmatpush1.msra.mxu0 0.0
  %349 = vmatprep.subr.mxu0 0.0
  %350 = vmatpush1.msra.mxu0 0.0
  %351 = vmatprep.subr.mxu0 0.0
  %352 = vmatpush1.msra.mxu0 0.0
  %353 = vmatprep.subr.mxu0 0.0
  %354 = vmatpush1.msra.mxu0 0.0
  %355 = vmatprep.subr.mxu0 0.0
  %356 = vmatpush1.msra.mxu0 0.0
  %357 = vmatprep.subr.mxu0 0.0
  %358 = vmatpush1.msra.mxu0 0.0
  %359 = vmatprep.subr.mxu0 0.0
  %360 = vmatpush1.msra.mxu0 0.0
  %361 = vmatprep.subr.mxu0 0.0
  %362 = vmatpush1.msra.mxu0 0.0
  %363 = vmatprep.subr.mxu0 0.0
  %364 = vmatpush1.msra.mxu0 0.0
  %365 = vmatprep.subr.mxu0 0.0
  %366 = vmatpush1.msra.mxu0 0.0
  %367 = vmatprep.subr.mxu0 0.0
  %368 = vmatpush1.msra.mxu0 0.0
  %369 = vmatprep.subr.mxu0 0.0
  %370 = vmatpush1.msra.mxu0 0.0
  %371 = vmatprep.subr.mxu0 0.0
  %372 = vmatpush1.msra.mxu0 0.0
  %373 = vmatprep.subr.mxu0 0.0
  %374 = vmatpush1.msra.mxu0 0.0
  %375 = vmatprep.subr.mxu0 0.0
  %376 = vmatpush1.msra.mxu0 0.0
  %377 = vmatprep.subr.mxu0 0.0
  %378 = vmatpush1.msra.mxu0 0.0
  %379 = vmatprep.subr.mxu0 0.0
  %380 = vmatpush1.msra.mxu0 0.0
  %381 = vmatprep.subr.mxu0 0.0
  %382 = vmatpush1.msra.mxu0 0.0
  %383 = vmatprep.subr.mxu0 0.0
  %384 = vmatpush1.msra.mxu0 0.0
  %385 = vmatprep.subr.mxu0 0.0
  %386 = vmatpush1.msra.mxu0 0.0
  %387 = vmatprep.subr.mxu0 0.0
  %388 = vmatpush1.msra.mxu0 0.0
  %389 = vmatprep.subr.mxu0 0.0
  %390 = vmatpush1.msra.mxu0 0.0
  %391 = vmatprep.subr.mxu0 0.0
  %392 = vmatpush1.msra.mxu0 0.0
  %393 = vmatprep.mubr.f32.mxu0 0.0
  %394 = vmatmul.mubr.f32.gmra.mrb[0].mxu0 %v324
  %v395 = vpop.f32.mrb[0].mxu0
  %v396 = vadd.f32 %v315, %v395
  %v397 = vpop.f32.mrb[0].mxu0
  %v398 = vadd.f32 %v315, %v397
  %399 = vmatprep.mubr.f32.mxu0 0.0
  %400 = vmatmul.mubr.f32.gmra.mrb[0].mxu0 %v327
  %v401 = vpop.f32.mrb[0].mxu0
  %v402 = vadd.f32 %v320, %v401
  %v403 = vpop.f32.mrb[0].mxu0
  %v404 = vadd.f32 %v320, %v403
  %405 = vdwg.mxu0
  %v406 = vmax.f32 %v396, 0.0
  %v407 = vmax.f32 %v398, 0.0
  %v408 = vmax.f32 %v402, 0.0
  %v409 = vmax.f32 %v404, 0.0
  %v410 = vadd.f32 %v406, %v407
  %411 = vadd.xlane.f32.xlu0 %v410
  %v412 = vpop.xlane.xlu0 %411
  %v413 = vadd.f32 %v408, %v409
  %414 = vadd.xlane.f32.xlu0 %v413
  %v415 = vpop.xlane.xlu0 %414
  %v416 = vadd.f32 %v412, 0.0
  %v417 = vadd.f32 %v415, 0.0
  %v418 = vmul.f32 %v406, %v406
  %v419 = vmul.f32 %v407, %v407
  %v420 = vmul.f32 %v408, %v408
  %v421 = vmul.f32 %v409, %v409
  %v422 = vadd.f32 %v418, %v419
  %423 = vadd.xlane.f32.xlu0 %v422
  %v424 = vpop.xlane.xlu0 %423
  %v425 = vadd.f32 %v420, %v421
  %426 = vadd.xlane.f32.xlu0 %v425
  %v427 = vpop.xlane.xlu0 %426
  %v428 = vadd.f32 %v424, 0.0
  %v429 = vadd.f32 %v427, 0.0
  %s430 = scalar_lea.vmem %s0, 32
  %v431 = vld [vmem:[%s430] sm:$0xff]
  %v432 = vld [vmem:[%s430 + $0x8] sm:$0xff]
  %v433 = vld [vmem:[%s430 + $0x10] sm:$0xff]
  %v434 = vmul.f32 %v431, %v72
  %v435 = vmul.f32 %v432, %v76
  %v436 = vmul.f32 %v433, %v74
  %440 = vrot.lane.b32.xlu0 %v434, 17
  %v441 = vpop.permute.xlu0 %440
  %442 = vrot.lane.b32.xlu0 %v435, 17
  %v443 = vpop.permute.xlu0 %442
  %444 = vrot.lane.b32.xlu0 %v436, 17
  %v445 = vpop.permute.xlu0 %444
  %v446 = vsel %vm92, %v441, %v443
  %v447 = vsel %vm92, %v443, %v445
  %450 = vst [vmem:[#allocation2] sm:$0xff] %v446
  %451 = vst [vmem:[#allocation2 + $0x8] sm:$0xff] %v447
  %v452 = vld [vmem:[%s430] sm:$0xff]
  %v453 = vld [vmem:[%s430 + $0x8] sm:$0xff]
  %v454 = vld [vmem:[%s430 + $0x10] sm:$0xff]
  %458 = vrot.lane.b32.xlu0 %v452, 16
  %v459 = vpop.permute.xlu0 %458
  %460 = vrot.lane.b32.xlu0 %v453, 16
  %v461 = vpop.permute.xlu0 %460
  %462 = vrot.lane.b32.xlu0 %v454, 16
  %v463 = vpop.permute.xlu0 %462
  %v464 = vsel %vm111, %v459, %v461
  %v465 = vsel %vm111, %v461, %v463
  %468 = vst [vmem:[#allocation2 + $0x10] sm:$0xff] %v464
  %469 = vst [vmem:[#allocation2 + $0x18] sm:$0xff] %v465
  %v470 = vld [vmem:[%s430] sm:$0xff]
  %v471 = vld [vmem:[%s430 + $0x8] sm:$0xff]
  %v472 = vld [vmem:[%s430 + $0x10] sm:$0xff]
  %v473 = vmul.f32 %v470, %v124
  %v474 = vmul.f32 %v471, %v128
  %v475 = vmul.f32 %v472, %v126
  %479 = vrot.lane.b32.xlu0 %v473, 15
  %v480 = vpop.permute.xlu0 %479
  %481 = vrot.lane.b32.xlu0 %v474, 15
  %v482 = vpop.permute.xlu0 %481
  %483 = vrot.lane.b32.xlu0 %v475, 15
  %v484 = vpop.permute.xlu0 %483
  %v485 = vsel %vm144, %v480, %v482
  %v486 = vsel %vm144, %v482, %v484
  %489 = vst [vmem:[#allocation2 + $0x20] sm:$0xff] %v485
  %490 = vst [vmem:[#allocation2 + $0x28] sm:$0xff] %v486
  %v491 = vld [vmem:[%s430] sm:$0xff]
  %v492 = vld [vmem:[%s430 + $0x8] sm:$0xff]
  %v493 = vld [vmem:[%s430 + $0x10] sm:$0xff]
  %v494 = vmul.f32 %v491, %v155
  %v495 = vmul.f32 %v492, %v159
  %v496 = vmul.f32 %v493, %v157
  %500 = vrot.lane.b32.xlu0 %v494, 1
  %v501 = vpop.permute.xlu0 %500
  %502 = vrot.lane.b32.xlu0 %v495, 1
  %v503 = vpop.permute.xlu0 %502
  %504 = vrot.lane.b32.xlu0 %v496, 1
  %v505 = vpop.permute.xlu0 %504
  %v506 = vsel %vm175, %v501, %v503
  %v507 = vsel %vm175, %v503, %v505
  %510 = vst [vmem:[#allocation2 + $0x30] sm:$0xff] %v506
  %511 = vst [vmem:[#allocation2 + $0x38] sm:$0xff] %v507
  %v512 = vld [vmem:[%s430 + $0x8] sm:$0xff]
  %v513 = vld [vmem:[%s430 + $0x10] sm:$0xff]
  %514 = vst [vmem:[#allocation2 + $0x40] sm:$0xff] %v512
  %515 = vst [vmem:[#allocation2 + $0x48] sm:$0xff] %v513
  %v516 = vld [vmem:[%s430 + $0x8] sm:$0xff]
  %v517 = vld [vmem:[%s430 + $0x10] sm:$0xff]
  %v518 = vld [vmem:[%s430 + $0x18] sm:$0xff]
  %v519 = vmul.f32 %v516, %v190
  %v520 = vmul.f32 %v517, %v193
  %v521 = vmul.f32 %v518, %v192
  %525 = vrot.lane.b32.xlu0 %v519, 127
  %v526 = vpop.permute.xlu0 %525
  %527 = vrot.lane.b32.xlu0 %v520, 127
  %v528 = vpop.permute.xlu0 %527
  %529 = vrot.lane.b32.xlu0 %v521, 127
  %v530 = vpop.permute.xlu0 %529
  %v531 = vsel %vm158, %v526, %v528
  %v532 = vsel %vm158, %v528, %v530
  %535 = vst [vmem:[#allocation2 + $0x50] sm:$0xff] %v531
  %536 = vst [vmem:[#allocation2 + $0x58] sm:$0xff] %v532
  %v537 = vld [vmem:[%s430 + $0x8] sm:$0xff]
  %v538 = vld [vmem:[%s430 + $0x10] sm:$0xff]
  %v539 = vld [vmem:[%s430 + $0x18] sm:$0xff]
  %v540 = vmul.f32 %v537, %v219
  %v541 = vmul.f32 %v538, %v222
  %v542 = vmul.f32 %v539, %v221
  %546 = vrot.lane.b32.xlu0 %v540, 113
  %v547 = vpop.permute.xlu0 %546
  %548 = vrot.lane.b32.xlu0 %v541, 113
  %v549 = vpop.permute.xlu0 %548
  %550 = vrot.lane.b32.xlu0 %v542, 113
  %v551 = vpop.permute.xlu0 %550
  %v552 = vsel %vm127, %v547, %v549
  %v553 = vsel %vm127, %v549, %v551
  %556 = vst [vmem:[#allocation2 + $0x60] sm:$0xff] %v552
  %557 = vst [vmem:[#allocation2 + $0x68] sm:$0xff] %v553
  %v558 = vld [vmem:[%s430 + $0x8] sm:$0xff]
  %v559 = vld [vmem:[%s430 + $0x10] sm:$0xff]
  %v560 = vld [vmem:[%s430 + $0x18] sm:$0xff]
  %564 = vrot.lane.b32.xlu0 %v558, 112
  %v565 = vpop.permute.xlu0 %564
  %566 = vrot.lane.b32.xlu0 %v559, 112
  %v567 = vpop.permute.xlu0 %566
  %568 = vrot.lane.b32.xlu0 %v560, 112
  %v569 = vpop.permute.xlu0 %568
  %v570 = vsel %vm256, %v565, %v567
  %v571 = vsel %vm256, %v567, %v569
  %574 = vst [vmem:[#allocation2 + $0x70] sm:$0xff] %v570
  %575 = vst [vmem:[#allocation2 + $0x78] sm:$0xff] %v571
  %v576 = vld [vmem:[%s430 + $0x8] sm:$0xff]
  %v577 = vld [vmem:[%s430 + $0x10] sm:$0xff]
  %v578 = vld [vmem:[%s430 + $0x18] sm:$0xff]
  %v579 = vmul.f32 %v576, %v267
  %v580 = vmul.f32 %v577, %v270
  %v581 = vmul.f32 %v578, %v269
  %585 = vrot.lane.b32.xlu0 %v579, 111
  %v586 = vpop.permute.xlu0 %585
  %587 = vrot.lane.b32.xlu0 %v580, 111
  %v588 = vpop.permute.xlu0 %587
  %589 = vrot.lane.b32.xlu0 %v581, 111
  %v590 = vpop.permute.xlu0 %589
  %v591 = vsel %vm75, %v586, %v588
  %v592 = vsel %vm75, %v588, %v590
  %595 = vst [vmem:[#allocation2 + $0x80] sm:$0xff] %v591
  %596 = vst [vmem:[#allocation2 + $0x88] sm:$0xff] %v592
  %v597 = vld [vmem:[%s1] sm:$0xff]
  %v598 = vld [vmem:[%s1 + $0x8] sm:$0xff]
  %v599 = vld [vmem:[#allocation2] sm:$0xff]
  %v600 = vld [vmem:[#allocation2 + $0x8] sm:$0xff]
  %v601 = vld [vmem:[#allocation2 + $0x10] sm:$0xff]
  %v602 = vld [vmem:[#allocation2 + $0x18] sm:$0xff]
  %v603 = vld [vmem:[#allocation2 + $0x20] sm:$0xff]
  %v604 = vld [vmem:[#allocation2 + $0x28] sm:$0xff]
  %v605 = vld [vmem:[#allocation2 + $0x30] sm:$0xff]
  %v606 = vld [vmem:[#allocation2 + $0x38] sm:$0xff]
  %v607 = vld [vmem:[#allocation2 + $0x40] sm:$0xff]
  %v608 = vld [vmem:[#allocation2 + $0x48] sm:$0xff]
  %v609 = vld [vmem:[#allocation2 + $0x50] sm:$0xff]
  %v610 = vld [vmem:[#allocation2 + $0x58] sm:$0xff]
  %v611 = vld [vmem:[#allocation2 + $0x60] sm:$0xff]
  %v612 = vld [vmem:[#allocation2 + $0x68] sm:$0xff]
  %v613 = vld [vmem:[#allocation2 + $0x70] sm:$0xff]
  %v614 = vld [vmem:[#allocation2 + $0x78] sm:$0xff]
  %v615 = vld [vmem:[#allocation2 + $0x80] sm:$0xff]
  %v616 = vld [vmem:[#allocation2 + $0x88] sm:$0xff]
  %v618 = vsel %vm322, %v597, 0
  %v621 = vsel %vm322, %v598, 0
  %623 = vmatprep.subr.mxu0 %v600
  %624 = vmatpush1.msra.mxu0 %v599
  %625 = vmatprep.subr.mxu0 %v602
  %626 = vmatpush1.msra.mxu0 %v601
  %627 = vmatprep.subr.mxu0 %v604
  %628 = vmatpush1.msra.mxu0 %v603
  %629 = vmatprep.subr.mxu0 %v606
  %630 = vmatpush1.msra.mxu0 %v605
  %631 = vmatprep.subr.mxu0 %v608
  %632 = vmatpush1.msra.mxu0 %v607
  %633 = vmatprep.subr.mxu0 %v610
  %634 = vmatpush1.msra.mxu0 %v609
  %635 = vmatprep.subr.mxu0 %v612
  %636 = vmatpush1.msra.mxu0 %v611
  %637 = vmatprep.subr.mxu0 %v614
  %638 = vmatpush1.msra.mxu0 %v613
  %639 = vmatprep.subr.mxu0 %v616
  %640 = vmatpush1.msra.mxu0 %v615
  %641 = vmatprep.subr.mxu0 0.0
  %642 = vmatpush1.msra.mxu0 0.0
  %643 = vmatprep.subr.mxu0 0.0
  %644 = vmatpush1.msra.mxu0 0.0
  %645 = vmatprep.subr.mxu0 0.0
  %646 = vmatpush1.msra.mxu0 0.0
  %647 = vmatprep.subr.mxu0 0.0
  %648 = vmatpush1.msra.mxu0 0.0
  %649 = vmatprep.subr.mxu0 0.0
  %650 = vmatpush1.msra.mxu0 0.0
  %651 = vmatprep.subr.mxu0 0.0
  %652 = vmatpush1.msra.mxu0 0.0
  %653 = vmatprep.subr.mxu0 0.0
  %654 = vmatpush1.msra.mxu0 0.0
  %655 = vmatprep.subr.mxu0 0.0
  %656 = vmatpush1.msra.mxu0 0.0
  %657 = vmatprep.subr.mxu0 0.0
  %658 = vmatpush1.msra.mxu0 0.0
  %659 = vmatprep.subr.mxu0 0.0
  %660 = vmatpush1.msra.mxu0 0.0
  %661 = vmatprep.subr.mxu0 0.0
  %662 = vmatpush1.msra.mxu0 0.0
  %663 = vmatprep.subr.mxu0 0.0
  %664 = vmatpush1.msra.mxu0 0.0
  %665 = vmatprep.subr.mxu0 0.0
  %666 = vmatpush1.msra.mxu0 0.0
  %667 = vmatprep.subr.mxu0 0.0
  %668 = vmatpush1.msra.mxu0 0.0
  %669 = vmatprep.subr.mxu0 0.0
  %670 = vmatpush1.msra.mxu0 0.0
  %671 = vmatprep.subr.mxu0 0.0
  %672 = vmatpush1.msra.mxu0 0.0
  %673 = vmatprep.subr.mxu0 0.0
  %674 = vmatpush1.msra.mxu0 0.0
  %675 = vmatprep.subr.mxu0 0.0
  %676 = vmatpush1.msra.mxu0 0.0
  %677 = vmatprep.subr.mxu0 0.0
  %678 = vmatpush1.msra.mxu0 0.0
  %679 = vmatprep.subr.mxu0 0.0
  %680 = vmatpush1.msra.mxu0 0.0
  %681 = vmatprep.subr.mxu0 0.0
  %682 = vmatpush1.msra.mxu0 0.0
  %683 = vmatprep.subr.mxu0 0.0
  %684 = vmatpush1.msra.mxu0 0.0
  %685 = vmatprep.subr.mxu0 0.0
  %686 = vmatpush1.msra.mxu0 0.0
  %687 = vmatprep.mubr.f32.mxu0 0.0
  %688 = vmatmul.mubr.f32.gmra.mrb[0].mxu0 %v618
  %v689 = vpop.f32.mrb[0].mxu0
  %v690 = vadd.f32 %v315, %v689
  %v691 = vpop.f32.mrb[0].mxu0
  %v692 = vadd.f32 %v315, %v691
  %693 = vmatprep.mubr.f32.mxu0 0.0
  %694 = vmatmul.mubr.f32.gmra.mrb[0].mxu0 %v621
  %v695 = vpop.f32.mrb[0].mxu0
  %v696 = vadd.f32 %v320, %v695
  %v697 = vpop.f32.mrb[0].mxu0
  %v698 = vadd.f32 %v320, %v697
  %699 = vdwg.mxu0
  %v700 = vmax.f32 %v690, 0.0
  %v701 = vmax.f32 %v692, 0.0
  %v702 = vmax.f32 %v696, 0.0
  %v703 = vmax.f32 %v698, 0.0
  %v704 = vadd.f32 %v700, %v701
  %705 = vadd.xlane.f32.xlu0 %v704
  %v706 = vpop.xlane.xlu0 %705
  %v707 = vadd.f32 %v702, %v703
  %708 = vadd.xlane.f32.xlu0 %v707
  %v709 = vpop.xlane.xlu0 %708
  %v710 = vadd.f32 %v416, %v706
  %v711 = vadd.f32 %v417, %v709
  %v712 = vmul.f32 %v700, %v700
  %v713 = vmul.f32 %v701, %v701
  %v714 = vmul.f32 %v702, %v702
  %v715 = vmul.f32 %v703, %v703
  %v716 = vadd.f32 %v712, %v713
  %717 = vadd.xlane.f32.xlu0 %v716
  %v718 = vpop.xlane.xlu0 %717
  %v719 = vadd.f32 %v714, %v715
  %720 = vadd.xlane.f32.xlu0 %v719
  %v721 = vpop.xlane.xlu0 %720
  %v722 = vadd.f32 %v428, %v718
  %v723 = vadd.f32 %v429, %v721
  %v724 = vrcp.pop 512.0
  %v725 = vmul.f32 %v710, %v724
  %v726 = vmul.f32 %v711, %v724
  %v727 = vmul.f32 %v722, %v724
  %v728 = vmul.f32 %v723, %v724
  %v729 = vmul.f32 %v725, %v725
  %v730 = vmul.f32 %v726, %v726
  %v731 = vsub.f32 %v727, %v729
  %v732 = vsub.f32 %v728, %v730
  %v733 = vadd.f32 %v731, 1e-05
  %v734 = vadd.f32 %v732, 1e-05
  %v735 = vrsqrt.pop %v733
  %v736 = vrsqrt.pop %v734
  %v737 = vld [vmem:[%s3] sm:$0xff]
  %v738 = vld [vmem:[%s3 + $0x8] sm:$0xff]
  %v739 = vmul.f32 %v737, %v735
  %v740 = vmul.f32 %v738, %v736
  %v741 = vmul.f32 %v725, %v739
  %v742 = vmul.f32 %v726, %v740
  %745 = vrot.lane.b32.xlu0 %v741, 1
  %v746 = vpop.permute.xlu0 %745
  %747 = vrot.lane.b32.xlu0 %v742, 1
  %v748 = vpop.permute.xlu0 %747
  %v751 = vsub.f32 %v737, %v746
  %v752 = vsub.f32 %v738, %v748
  %v753 = vld [vmem:[%s3] sm:$0xf]
  %755 = vset.pattern.permute.xlu0 1
  %756 = vperm.xlu0 %755, %v739
  %v757 = vpop.permute.xlu0 %756
  %760 = vset.pattern.permute.xlu0 1
  %761 = vperm.xlu0 %760, %v740
  %v762 = vpop.permute.xlu0 %761
  %v764 = vmul.f32 %v406, %v757
  %v765 = vmul.f32 %v407, %v757
  %v766 = vmul.f32 %v408, %v762
  %v767 = vmul.f32 %v409, %v762
  %769 = vset.pattern.permute.xlu0 2
  %770 = vperm.xlu0 %769, %v751
  %v771 = vpop.permute.xlu0 %770
  %774 = vset.pattern.permute.xlu0 2
  %775 = vperm.xlu0 %774, %v752
  %v776 = vpop.permute.xlu0 %775
  %v778 = vadd.f32 %v764, %v771
  %v779 = vadd.f32 %v765, %v771
  %v780 = vadd.f32 %v766, %v776
  %v781 = vadd.f32 %v767, %v776
  %782 = vst [vmem:[#allocation3 + $0x8] sm:$0xff] %v778
  %783 = vst [vmem:[#allocation3 + $0x10] sm:$0xff] %v779
  %784 = vst [vmem:[#allocation3 + $0x28] sm:$0xff] %v780
  %785 = vst [vmem:[#allocation3 + $0x30] sm:$0xff] %v781
  %v786 = vld [vmem:[#allocation3] sm:$0xff]
  %v787 = vld [vmem:[#allocation3 + $0x8] sm:$0xff]
  %v788 = vld [vmem:[#allocation3 + $0x10] sm:$0xff]
  %v789 = vld [vmem:[#allocation3 + $0x20] sm:$0xff]
  %v790 = vld [vmem:[#allocation3 + $0x28] sm:$0xff]
  %v791 = vld [vmem:[#allocation3 + $0x30] sm:$0xff]
  %v792 = vmul.f32 %v786, %v72
  %v793 = vmul.f32 %v787, %v76
  %v794 = vmul.f32 %v788, %v74
  %v795 = vmul.f32 %v789, %v72
  %v796 = vmul.f32 %v790, %v76
  %v797 = vmul.f32 %v791, %v74
  %804 = vrot.lane.b32.xlu0 %v792, 17
  %v805 = vpop.permute.xlu0 %804
  %806 = vrot.lane.b32.xlu0 %v793, 17
  %v807 = vpop.permute.xlu0 %806
  %808 = vrot.lane.b32.xlu0 %v794, 17
  %v809 = vpop.permute.xlu0 %808
  %810 = vrot.lane.b32.xlu0 %v795, 17
  %v811 = vpop.permute.xlu0 %810
  %812 = vrot.lane.b32.xlu0 %v796, 17
  %v813 = vpop.permute.xlu0 %812
  %814 = vrot.lane.b32.xlu0 %v797, 17
  %v815 = vpop.permute.xlu0 %814
  %v816 = vsel %vm92, %v805, %v807
  %v817 = vsel %vm92, %v807, %v809
  %v818 = vsel %vm92, %v811, %v813
  %v819 = vsel %vm92, %v813, %v815
  %824 = vst [vmem:[#allocation2] sm:$0xff] %v816
  %825 = vst [vmem:[#allocation2 + $0x8] sm:$0xff] %v817
  %826 = vst [vmem:[#allocation2 + $0x10] sm:$0xff] %v818
  %827 = vst [vmem:[#allocation2 + $0x18] sm:$0xff] %v819
  %v828 = vld [vmem:[#allocation3] sm:$0xff]
  %v829 = vld [vmem:[#allocation3 + $0x8] sm:$0xff]
  %v830 = vld [vmem:[#allocation3 + $0x10] sm:$0xff]
  %v831 = vld [vmem:[#allocation3 + $0x20] sm:$0xff]
  %v832 = vld [vmem:[#allocation3 + $0x28] sm:$0xff]
  %v833 = vld [vmem:[#allocation3 + $0x30] sm:$0xff]
  %840 = vrot.lane.b32.xlu0 %v828, 16
  %v841 = vpop.permute.xlu0 %840
  %842 = vrot.lane.b32.xlu0 %v829, 16
  %v843 = vpop.permute.xlu0 %842
  %844 = vrot.lane.b32.xlu0 %v830, 16
  %v845 = vpop.permute.xlu0 %844
  %846 = vrot.lane.b32.xlu0 %v831, 16
  %v847 = vpop.permute.xlu0 %846
  %848 = vrot.lane.b32.xlu0 %v832, 16
  %v849 = vpop.permute.xlu0 %848
  %850 = vrot.lane.b32.xlu0 %v833, 16
  %v851 = vpop.permute.xlu0 %850
  %v852 = vsel %vm111, %v841, %v843
  %v853 = vsel %vm111, %v843, %v845
  %v854 = vsel %vm111, %v847, %v849
  %v855 = vsel %vm111, %v849, %v851
  %860 = vst [vmem:[#allocation2 + $0x20] sm:$0xff] %v852
  %861 = vst [vmem:[#allocation2 + $0x28] sm:$0xff] %v853
  %862 = vst [vmem:[#allocation2 + $0x30] sm:$0xff] %v854
  %863 = vst [vmem:[#allocation2 + $0x38] sm:$0xff] %v855
  %v864 = vld [vmem:[#allocation3] sm:$0xff]
  %v865 = vld [vmem:[#allocation3 + $0x8] sm:$0xff]
  %v866 = vld [vmem:[#allocation3 + $0x10] sm:$0xff]
  %v867 = vld [vmem:[#allocation3 + $0x20] sm:$0xff]
  %v868 = vld [vmem:[#allocation3 + $0x28] sm:$0xff]
  %v869 = vld [vmem:[#allocation3 + $0x30] sm:$0xff]
  %v870 = vmul.f32 %v864, %v124
  %v871 = vmul.f32 %v865, %v128
  %v872 = vmul.f32 %v866, %v126
  %v873 = vmul.f32 %v867, %v124
  %v874 = vmul.f32 %v868, %v128
  %v875 = vmul.f32 %v869, %v126
  %882 = vrot.lane.b32.xlu0 %v870, 15
  %v883 = vpop.permute.xlu0 %882
  %884 = vrot.lane.b32.xlu0 %v871, 15
  %v885 = vpop.permute.xlu0 %884
  %886 = vrot.lane.b32.xlu0 %v872, 15
  %v887 = vpop.permute.xlu0 %886
  %888 = vrot.lane.b32.xlu0 %v873, 15
  %v889 = vpop.permute.xlu0 %888
  %890 = vrot.lane.b32.xlu0 %v874, 15
  %v891 = vpop.permute.xlu0 %890
  %892 = vrot.lane.b32.xlu0 %v875, 15
  %v893 = vpop.permute.xlu0 %892
  %v894 = vsel %vm144, %v883, %v885
  %v895 = vsel %vm144, %v885, %v887
  %v896 = vsel %vm144, %v889, %v891
  %v897 = vsel %vm144, %v891, %v893
  %902 = vst [vmem:[#allocation2 + $0x40] sm:$0xff] %v894
  %903 = vst [vmem:[#allocation2 + $0x48] sm:$0xff] %v895
  %904 = vst [vmem:[#allocation2 + $0x50] sm:$0xff] %v896
  %905 = vst [vmem:[#allocation2 + $0x58] sm:$0xff] %v897
  %v906 = vld [vmem:[#allocation3] sm:$0xff]
  %v907 = vld [vmem:[#allocation3 + $0x8] sm:$0xff]
  %v908 = vld [vmem:[#allocation3 + $0x10] sm:$0xff]
  %v909 = vld [vmem:[#allocation3 + $0x20] sm:$0xff]
  %v910 = vld [vmem:[#allocation3 + $0x28] sm:$0xff]
  %v911 = vld [vmem:[#allocation3 + $0x30] sm:$0xff]
  %v912 = vmul.f32 %v906, %v155
  %v913 = vmul.f32 %v907, %v159
  %v914 = vmul.f32 %v908, %v157
  %v915 = vmul.f32 %v909, %v155
  %v916 = vmul.f32 %v910, %v159
  %v917 = vmul.f32 %v911, %v157
  %924 = vrot.lane.b32.xlu0 %v912, 1
  %v925 = vpop.permute.xlu0 %924
  %926 = vrot.lane.b32.xlu0 %v913, 1
  %v927 = vpop.permute.xlu0 %926
  %928 = vrot.lane.b32.xlu0 %v914, 1
  %v929 = vpop.permute.xlu0 %928
  %930 = vrot.lane.b32.xlu0 %v915, 1
  %v931 = vpop.permute.xlu0 %930
  %932 = vrot.lane.b32.xlu0 %v916, 1
  %v933 = vpop.permute.xlu0 %932
  %934 = vrot.lane.b32.xlu0 %v917, 1
  %v935 = vpop.permute.xlu0 %934
  %v936 = vsel %vm175, %v925, %v927
  %v937 = vsel %vm175, %v927, %v929
  %v938 = vsel %vm175, %v931, %v933
  %v939 = vsel %vm175, %v933, %v935
  %944 = vst [vmem:[#allocation2 + $0x60] sm:$0xff] %v936
  %945 = vst [vmem:[#allocation2 + $0x68] sm:$0xff] %v937
  %946 = vst [vmem:[#allocation2 + $0x70] sm:$0xff] %v938
  %947 = vst [vmem:[#allocation2 + $0x78] sm:$0xff] %v939
  %v948 = vld [vmem:[#allocation3 + $0x8] sm:$0xff]
  %v949 = vld [vmem:[#allocation3 + $0x10] sm:$0xff]
  %v950 = vld [vmem:[#allocation3 + $0x28] sm:$0xff]
  %v951 = vld [vmem:[#allocation3 + $0x30] sm:$0xff]
  %952 = vst [vmem:[#allocation2 + $0x80] sm:$0xff] %v948
  %953 = vst [vmem:[#allocation2 + $0x88] sm:$0xff] %v949
  %954 = vst [vmem:[#allocation2 + $0x90] sm:$0xff] %v950
  %955 = vst [vmem:[#allocation2 + $0x98] sm:$0xff] %v951
  %v956 = vld [vmem:[#allocation3 + $0x8] sm:$0xff]
  %v957 = vld [vmem:[#allocation3 + $0x10] sm:$0xff]
  %v958 = vld [vmem:[#allocation3 + $0x18] sm:$0xff]
  %v959 = vld [vmem:[#allocation3 + $0x28] sm:$0xff]
  %v960 = vld [vmem:[#allocation3 + $0x30] sm:$0xff]
  %v961 = vld [vmem:[#allocation3 + $0x38] sm:$0xff]
  %v962 = vmul.f32 %v956, %v190
  %v963 = vmul.f32 %v957, %v193
  %v964 = vmul.f32 %v958, %v192
  %v965 = vmul.f32 %v959, %v190
  %v966 = vmul.f32 %v960, %v193
  %v967 = vmul.f32 %v961, %v192
  %974 = vrot.lane.b32.xlu0 %v962, 127
  %v975 = vpop.permute.xlu0 %974
  %976 = vrot.lane.b32.xlu0 %v963, 127
  %v977 = vpop.permute.xlu0 %976
  %978 = vrot.lane.b32.xlu0 %v964, 127
  %v979 = vpop.permute.xlu0 %978
  %980 = vrot.lane.b32.xlu0 %v965, 127
  %v981 = vpop.permute.xlu0 %980
  %982 = vrot.lane.b32.xlu0 %v966, 127
  %v983 = vpop.permute.xlu0 %982
  %984 = vrot.lane.b32.xlu0 %v967, 127
  %v985 = vpop.permute.xlu0 %984
  %v986 = vsel %vm158, %v975, %v977
  %v987 = vsel %vm158, %v977, %v979
  %v988 = vsel %vm158, %v981, %v983
  %v989 = vsel %vm158, %v983, %v985
  %994 = vst [vmem:[#allocation2 + $0xa0] sm:$0xff] %v986
  %995 = vst [vmem:[#allocation2 + $0xa8] sm:$0xff] %v987
  %996 = vst [vmem:[#allocation2 + $0xb0] sm:$0xff] %v988
  %997 = vst [vmem:[#allocation2 + $0xb8] sm:$0xff] %v989
  %v998 = vld [vmem:[#allocation3 + $0x8] sm:$0xff]
  %v999 = vld [vmem:[#allocation3 + $0x10] sm:$0xff]
  %v1000 = vld [vmem:[#allocation3 + $0x18] sm:$0xff]
  %v1001 = vld [vmem:[#allocation3 + $0x28] sm:$0xff]
  %v1002 = vld [vmem:[#allocation3 + $0x30] sm:$0xff]
  %v1003 = vld [vmem:[#allocation3 + $0x38] sm:$0xff]
  %v1004 = vmul.f32 %v998, %v219
  %v1005 = vmul.f32 %v999, %v222
  %v1006 = vmul.f32 %v1000, %v221
  %v1007 = vmul.f32 %v1001, %v219
  %v1008 = vmul.f32 %v1002, %v222
  %v1009 = vmul.f32 %v1003, %v221
  %1016 = vrot.lane.b32.xlu0 %v1004, 113
  %v1017 = vpop.permute.xlu0 %1016
  %1018 = vrot.lane.b32.xlu0 %v1005, 113
  %v1019 = vpop.permute.xlu0 %1018
  %1020 = vrot.lane.b32.xlu0 %v1006, 113
  %v1021 = vpop.permute.xlu0 %1020
  %1022 = vrot.lane.b32.xlu0 %v1007, 113
  %v1023 = vpop.permute.xlu0 %1022
  %1024 = vrot.lane.b32.xlu0 %v1008, 113
  %v1025 = vpop.permute.xlu0 %1024
  %1026 = vrot.lane.b32.xlu0 %v1009, 113
  %v1027 = vpop.permute.xlu0 %1026
  %v1028 = vsel %vm127, %v1017, %v1019
  %v1029 = vsel %vm127, %v1019, %v1021
  %v1030 = vsel %vm127, %v1023, %v1025
  %v1031 = vsel %vm127, %v1025, %v1027
  %1036 = vst [vmem:[#allocation2 + $0xc0] sm:$0xff] %v1028
  %1037 = vst [vmem:[#allocation2 + $0xc8] sm:$0xff] %v1029
  %1038 = vst [vmem:[#allocation2 + $0xd0] sm:$0xff] %v1030
  %1039 = vst [vmem:[#allocation2 + $0xd8] sm:$0xff] %v1031
  %v1040 = vld [vmem:[#allocation3 + $0x8] sm:$0xff]
  %v1041 = vld [vmem:[#allocation3 + $0x10] sm:$0xff]
  %v1042 = vld [vmem:[#allocation3 + $0x18] sm:$0xff]
  %v1043 = vld [vmem:[#allocation3 + $0x28] sm:$0xff]
  %v1044 = vld [vmem:[#allocation3 + $0x30] sm:$0xff]
  %v1045 = vld [vmem:[#allocation3 + $0x38] sm:$0xff]
  %1052 = vrot.lane.b32.xlu0 %v1040, 112
  %v1053 = vpop.permute.xlu0 %1052
  %1054 = vrot.lane.b32.xlu0 %v1041, 112
  %v1055 = vpop.permute.xlu0 %1054
  %1056 = vrot.lane.b32.xlu0 %v1042, 112
  %v1057 = vpop.permute.xlu0 %1056
  %1058 = vrot.lane.b32.xlu0 %v1043, 112
  %v1059 = vpop.permute.xlu0 %1058
  %1060 = vrot.lane.b32.xlu0 %v1044, 112
  %v1061 = vpop.permute.xlu0 %1060
  %1062 = vrot.lane.b32.xlu0 %v1045, 112
  %v1063 = vpop.permute.xlu0 %1062
  %v1064 = vsel %vm256, %v1053, %v1055
  %v1065 = vsel %vm256, %v1055, %v1057
  %v1066 = vsel %vm256, %v1059, %v1061
  %v1067 = vsel %vm256, %v1061, %v1063
  %1072 = vst [vmem:[#allocation2 + $0xe0] sm:$0xff] %v1064
  %1073 = vst [vmem:[#allocation2 + $0xe8] sm:$0xff] %v1065
  %1074 = vst [vmem:[#allocation2 + $0xf0] sm:$0xff] %v1066
  %1075 = vst [vmem:[#allocation2 + $0xf8] sm:$0xff] %v1067
  %v1076 = vld [vmem:[#allocation3 + $0x8] sm:$0xff]
  %v1077 = vld [vmem:[#allocation3 + $0x10] sm:$0xff]
  %v1078 = vld [vmem:[#allocation3 + $0x18] sm:$0xff]
  %v1079 = vld [vmem:[#allocation3 + $0x28] sm:$0xff]
  %v1080 = vld [vmem:[#allocation3 + $0x30] sm:$0xff]
  %v1081 = vld [vmem:[#allocation3 + $0x38] sm:$0xff]
  %v1082 = vmul.f32 %v1076, %v267
  %v1083 = vmul.f32 %v1077, %v270
  %v1084 = vmul.f32 %v1078, %v269
  %v1085 = vmul.f32 %v1079, %v267
  %v1086 = vmul.f32 %v1080, %v270
  %v1087 = vmul.f32 %v1081, %v269
  %1094 = vrot.lane.b32.xlu0 %v1082, 111
  %v1095 = vpop.permute.xlu0 %1094
  %1096 = vrot.lane.b32.xlu0 %v1083, 111
  %v1097 = vpop.permute.xlu0 %1096
  %1098 = vrot.lane.b32.xlu0 %v1084, 111
  %v1099 = vpop.permute.xlu0 %1098
  %1100 = vrot.lane.b32.xlu0 %v1085, 111
  %v1101 = vpop.permute.xlu0 %1100
  %1102 = vrot.lane.b32.xlu0 %v1086, 111
  %v1103 = vpop.permute.xlu0 %1102
  %1104 = vrot.lane.b32.xlu0 %v1087, 111
  %v1105 = vpop.permute.xlu0 %1104
  %v1106 = vsel %vm75, %v1095, %v1097
  %v1107 = vsel %vm75, %v1097, %v1099
  %v1108 = vsel %vm75, %v1101, %v1103
  %v1109 = vsel %vm75, %v1103, %v1105
  %1114 = vst [vmem:[#allocation2 + $0x100] sm:$0xff] %v1106
  %1115 = vst [vmem:[#allocation2 + $0x108] sm:$0xff] %v1107
  %1116 = vst [vmem:[#allocation2 + $0x110] sm:$0xff] %v1108
  %1117 = vst [vmem:[#allocation2 + $0x118] sm:$0xff] %v1109
  %v1118 = vld [vmem:[%s2] sm:$0xff]
  %v1119 = vld [vmem:[#allocation2] sm:$0xff]
  %v1120 = vld [vmem:[#allocation2 + $0x8] sm:$0xff]
  %v1121 = vld [vmem:[#allocation2 + $0x10] sm:$0xff]
  %v1122 = vld [vmem:[#allocation2 + $0x18] sm:$0xff]
  %v1123 = vld [vmem:[#allocation2 + $0x20] sm:$0xff]
  %v1124 = vld [vmem:[#allocation2 + $0x28] sm:$0xff]
  %v1125 = vld [vmem:[#allocation2 + $0x30] sm:$0xff]
  %v1126 = vld [vmem:[#allocation2 + $0x38] sm:$0xff]
  %v1127 = vld [vmem:[#allocation2 + $0x40] sm:$0xff]
  %v1128 = vld [vmem:[#allocation2 + $0x48] sm:$0xff]
  %v1129 = vld [vmem:[#allocation2 + $0x50] sm:$0xff]
  %v1130 = vld [vmem:[#allocation2 + $0x58] sm:$0xff]
  %v1131 = vld [vmem:[#allocation2 + $0x60] sm:$0xff]
  %v1132 = vld [vmem:[#allocation2 + $0x68] sm:$0xff]
  %v1133 = vld [vmem:[#allocation2 + $0x70] sm:$0xff]
  %v1134 = vld [vmem:[#allocation2 + $0x78] sm:$0xff]
  %v1135 = vld [vmem:[#allocation2 + $0x80] sm:$0xff]
  %v1136 = vld [vmem:[#allocation2 + $0x88] sm:$0xff]
  %v1137 = vld [vmem:[#allocation2 + $0x90] sm:$0xff]
  %v1138 = vld [vmem:[#allocation2 + $0x98] sm:$0xff]
  %v1139 = vld [vmem:[#allocation2 + $0xa0] sm:$0xff]
  %v1140 = vld [vmem:[#allocation2 + $0xa8] sm:$0xff]
  %v1141 = vld [vmem:[#allocation2 + $0xb0] sm:$0xff]
  %v1142 = vld [vmem:[#allocation2 + $0xb8] sm:$0xff]
  %v1143 = vld [vmem:[#allocation2 + $0xc0] sm:$0xff]
  %v1144 = vld [vmem:[#allocation2 + $0xc8] sm:$0xff]
  %v1145 = vld [vmem:[#allocation2 + $0xd0] sm:$0xff]
  %v1146 = vld [vmem:[#allocation2 + $0xd8] sm:$0xff]
  %v1147 = vld [vmem:[#allocation2 + $0xe0] sm:$0xff]
  %v1148 = vld [vmem:[#allocation2 + $0xe8] sm:$0xff]
  %v1149 = vld [vmem:[#allocation2 + $0xf0] sm:$0xff]
  %v1150 = vld [vmem:[#allocation2 + $0xf8] sm:$0xff]
  %v1151 = vld [vmem:[#allocation2 + $0x100] sm:$0xff]
  %v1152 = vld [vmem:[#allocation2 + $0x108] sm:$0xff]
  %v1153 = vld [vmem:[#allocation2 + $0x110] sm:$0xff]
  %v1154 = vld [vmem:[#allocation2 + $0x118] sm:$0xff]
  %1156 = vset.pattern.permute.xlu0 3
  %1157 = vperm.xlu0 %1156, %v753
  %v1158 = vpop.permute.xlu0 %1157
  %v1161 = vcombine.high %v1118, %v1118
  %v1162 = vsel %vm111, %v1161, 0
  %1164 = vmatprep.subr.mxu0 %v1120
  %1165 = vmatpush1.msra.mxu0 %v1119
  %1166 = vmatprep.subr.mxu0 %v1122
  %1167 = vmatpush1.msra.mxu0 %v1121
  %1168 = vmatprep.subr.mxu0 %v1124
  %1169 = vmatpush1.msra.mxu0 %v1123
  %1170 = vmatprep.subr.mxu0 %v1126
  %1171 = vmatpush1.msra.mxu0 %v1125
  %1172 = vmatprep.subr.mxu0 %v1128
  %1173 = vmatpush1.msra.mxu0 %v1127
  %1174 = vmatprep.subr.mxu0 %v1130
  %1175 = vmatpush1.msra.mxu0 %v1129
  %1176 = vmatprep.subr.mxu0 %v1132
  %1177 = vmatpush1.msra.mxu0 %v1131
  %1178 = vmatprep.subr.mxu0 %v1134
  %1179 = vmatpush1.msra.mxu0 %v1133
  %1180 = vmatprep.subr.mxu0 %v1136
  %1181 = vmatpush1.msra.mxu0 %v1135
  %1182 = vmatprep.subr.mxu0 %v1138
  %1183 = vmatpush1.msra.mxu0 %v1137
  %1184 = vmatprep.subr.mxu0 %v1140
  %1185 = vmatpush1.msra.mxu0 %v1139
  %1186 = vmatprep.subr.mxu0 %v1142
  %1187 = vmatpush1.msra.mxu0 %v1141
  %1188 = vmatprep.subr.mxu0 %v1144
  %1189 = vmatpush1.msra.mxu0 %v1143
  %1190 = vmatprep.subr.mxu0 %v1146
  %1191 = vmatpush1.msra.mxu0 %v1145
  %1192 = vmatprep.subr.mxu0 %v1148
  %1193 = vmatpush1.msra.mxu0 %v1147
  %1194 = vmatprep.subr.mxu0 %v1150
  %1195 = vmatpush1.msra.mxu0 %v1149
  %1196 = vmatprep.subr.mxu0 %v1152
  %1197 = vmatpush1.msra.mxu0 %v1151
  %1198 = vmatprep.subr.mxu0 %v1154
  %1199 = vmatpush1.msra.mxu0 %v1153
  %1200 = vmatprep.subr.mxu0 0.0
  %1201 = vmatpush1.msra.mxu0 0.0
  %1202 = vmatprep.subr.mxu0 0.0
  %1203 = vmatpush1.msra.mxu0 0.0
  %1204 = vmatprep.subr.mxu0 0.0
  %1205 = vmatpush1.msra.mxu0 0.0
  %1206 = vmatprep.subr.mxu0 0.0
  %1207 = vmatpush1.msra.mxu0 0.0
  %1208 = vmatprep.subr.mxu0 0.0
  %1209 = vmatpush1.msra.mxu0 0.0
  %1210 = vmatprep.subr.mxu0 0.0
  %1211 = vmatpush1.msra.mxu0 0.0
  %1212 = vmatprep.subr.mxu0 0.0
  %1213 = vmatpush1.msra.mxu0 0.0
  %1214 = vmatprep.subr.mxu0 0.0
  %1215 = vmatpush1.msra.mxu0 0.0
  %1216 = vmatprep.subr.mxu0 0.0
  %1217 = vmatpush1.msra.mxu0 0.0
  %1218 = vmatprep.subr.mxu0 0.0
  %1219 = vmatpush1.msra.mxu0 0.0
  %1220 = vmatprep.subr.mxu0 0.0
  %1221 = vmatpush1.msra.mxu0 0.0
  %1222 = vmatprep.subr.mxu0 0.0
  %1223 = vmatpush1.msra.mxu0 0.0
  %1224 = vmatprep.subr.mxu0 0.0
  %1225 = vmatpush1.msra.mxu0 0.0
  %1226 = vmatprep.subr.mxu0 0.0
  %1227 = vmatpush1.msra.mxu0 0.0
  %1228 = vmatprep.mubr.f32.mxu0 %v1162
  %1229 = vmatmul.mubr.f32.gmra.mrb[0].mxu0 %v1118
  %v1230 = vpop.f32.mrb[0].mxu0
  %v1231 = vadd.f32 %v1158, %v1230
  %v1232 = vpop.f32.mrb[0].mxu0
  %v1233 = vadd.f32 %v1158, %v1232
  %1234 = vdwg.mxu0
  %v1237 = vcombine.low %v1231, %v1233
  %1239 = vst [vmem:[%s4] sm:$0xff] %v1237
  %v1240 = vmul.f32 %v700, %v757
  %v1241 = vmul.f32 %v701, %v757
  %v1242 = vmul.f32 %v702, %v762
  %v1243 = vmul.f32 %v703, %v762
  %v1244 = vadd.f32 %v1240, %v771
  %v1245 = vadd.f32 %v1241, %v771
  %v1246 = vadd.f32 %v1242, %v776
  %v1247 = vadd.f32 %v1243, %v776
  %1248 = vst [vmem:[#allocation3 + $0x8] sm:$0xff] %v1244
  %1249 = vst [vmem:[#allocation3 + $0x10] sm:$0xff] %v1245
  %1250 = vst [vmem:[#allocation3 + $0x28] sm:$0xff] %v1246
  %1251 = vst [vmem:[#allocation3 + $0x30] sm:$0xff] %v1247
  %v1252 = vld [vmem:[#allocation3] sm:$0xff]
  %v1253 = vld [vmem:[#allocation3 + $0x8] sm:$0xff]
  %v1254 = vld [vmem:[#allocation3 + $0x10] sm:$0xff]
  %v1255 = vld [vmem:[#allocation3 + $0x20] sm:$0xff]
  %v1256 = vld [vmem:[#allocation3 + $0x28] sm:$0xff]
  %v1257 = vld [vmem:[#allocation3 + $0x30] sm:$0xff]
  %v1258 = vmul.f32 %v1252, %v72
  %v1259 = vmul.f32 %v1253, %v76
  %v1260 = vmul.f32 %v1254, %v74
  %v1261 = vmul.f32 %v1255, %v72
  %v1262 = vmul.f32 %v1256, %v76
  %v1263 = vmul.f32 %v1257, %v74
  %1270 = vrot.lane.b32.xlu0 %v1258, 17
  %v1271 = vpop.permute.xlu0 %1270
  %1272 = vrot.lane.b32.xlu0 %v1259, 17
  %v1273 = vpop.permute.xlu0 %1272
  %1274 = vrot.lane.b32.xlu0 %v1260, 17
  %v1275 = vpop.permute.xlu0 %1274
  %1276 = vrot.lane.b32.xlu0 %v1261, 17
  %v1277 = vpop.permute.xlu0 %1276
  %1278 = vrot.lane.b32.xlu0 %v1262, 17
  %v1279 = vpop.permute.xlu0 %1278
  %1280 = vrot.lane.b32.xlu0 %v1263, 17
  %v1281 = vpop.permute.xlu0 %1280
  %v1282 = vsel %vm92, %v1271, %v1273
  %v1283 = vsel %vm92, %v1273, %v1275
  %v1284 = vsel %vm92, %v1277, %v1279
  %v1285 = vsel %vm92, %v1279, %v1281
  %1290 = vst [vmem:[#allocation2] sm:$0xff] %v1282
  %1291 = vst [vmem:[#allocation2 + $0x8] sm:$0xff] %v1283
  %1292 = vst [vmem:[#allocation2 + $0x10] sm:$0xff] %v1284
  %1293 = vst [vmem:[#allocation2 + $0x18] sm:$0xff] %v1285
  %v1294 = vld [vmem:[#allocation3] sm:$0xff]
  %v1295 = vld [vmem:[#allocation3 + $0x8] sm:$0xff]
  %v1296 = vld [vmem:[#allocation3 + $0x10] sm:$0xff]
  %v1297 = vld [vmem:[#allocation3 + $0x20] sm:$0xff]
  %v1298 = vld [vmem:[#allocation3 + $0x28] sm:$0xff]
  %v1299 = vld [vmem:[#allocation3 + $0x30] sm:$0xff]
  %1306 = vrot.lane.b32.xlu0 %v1294, 16
  %v1307 = vpop.permute.xlu0 %1306
  %1308 = vrot.lane.b32.xlu0 %v1295, 16
  %v1309 = vpop.permute.xlu0 %1308
  %1310 = vrot.lane.b32.xlu0 %v1296, 16
  %v1311 = vpop.permute.xlu0 %1310
  %1312 = vrot.lane.b32.xlu0 %v1297, 16
  %v1313 = vpop.permute.xlu0 %1312
  %1314 = vrot.lane.b32.xlu0 %v1298, 16
  %v1315 = vpop.permute.xlu0 %1314
  %1316 = vrot.lane.b32.xlu0 %v1299, 16
  %v1317 = vpop.permute.xlu0 %1316
  %v1318 = vsel %vm111, %v1307, %v1309
  %v1319 = vsel %vm111, %v1309, %v1311
  %v1320 = vsel %vm111, %v1313, %v1315
  %v1321 = vsel %vm111, %v1315, %v1317
  %1326 = vst [vmem:[#allocation2 + $0x20] sm:$0xff] %v1318
  %1327 = vst [vmem:[#allocation2 + $0x28] sm:$0xff] %v1319
  %1328 = vst [vmem:[#allocation2 + $0x30] sm:$0xff] %v1320
  %1329 = vst [vmem:[#allocation2 + $0x38] sm:$0xff] %v1321
  %v1330 = vld [vmem:[#allocation3] sm:$0xff]
  %v1331 = vld [vmem:[#allocation3 + $0x8] sm:$0xff]
  %v1332 = vld [vmem:[#allocation3 + $0x10] sm:$0xff]
  %v1333 = vld [vmem:[#allocation3 + $0x20] sm:$0xff]
  %v1334 = vld [vmem:[#allocation3 + $0x28] sm:$0xff]
  %v1335 = vld [vmem:[#allocation3 + $0x30] sm:$0xff]
  %v1336 = vmul.f32 %v1330, %v124
  %v1337 = vmul.f32 %v1331, %v128
  %v1338 = vmul.f32 %v1332, %v126
  %v1339 = vmul.f32 %v1333, %v124
  %v1340 = vmul.f32 %v1334, %v128
  %v1341 = vmul.f32 %v1335, %v126
  %1348 = vrot.lane.b32.xlu0 %v1336, 15
  %v1349 = vpop.permute.xlu0 %1348
  %1350 = vrot.lane.b32.xlu0 %v1337, 15
  %v1351 = vpop.permute.xlu0 %1350
  %1352 = vrot.lane.b32.xlu0 %v1338, 15
  %v1353 = vpop.permute.xlu0 %1352
  %1354 = vrot.lane.b32.xlu0 %v1339, 15
  %v1355 = vpop.permute.xlu0 %1354
  %1356 = vrot.lane.b32.xlu0 %v1340, 15
  %v1357 = vpop.permute.xlu0 %1356
  %1358 = vrot.lane.b32.xlu0 %v1341, 15
  %v1359 = vpop.permute.xlu0 %1358
  %v1360 = vsel %vm144, %v1349, %v1351
  %v1361 = vsel %vm144, %v1351, %v1353
  %v1362 = vsel %vm144, %v1355, %v1357
  %v1363 = vsel %vm144, %v1357, %v1359
  %1368 = vst [vmem:[#allocation2 + $0x40] sm:$0xff] %v1360
  %1369 = vst [vmem:[#allocation2 + $0x48] sm:$0xff] %v1361
  %1370 = vst [vmem:[#allocation2 + $0x50] sm:$0xff] %v1362
  %1371 = vst [vmem:[#allocation2 + $0x58] sm:$0xff] %v1363
  %v1372 = vld [vmem:[#allocation3] sm:$0xff]
  %v1373 = vld [vmem:[#allocation3 + $0x8] sm:$0xff]
  %v1374 = vld [vmem:[#allocation3 + $0x10] sm:$0xff]
  %v1375 = vld [vmem:[#allocation3 + $0x20] sm:$0xff]
  %v1376 = vld [vmem:[#allocation3 + $0x28] sm:$0xff]
  %v1377 = vld [vmem:[#allocation3 + $0x30] sm:$0xff]
  %v1378 = vmul.f32 %v1372, %v155
  %v1379 = vmul.f32 %v1373, %v159
  %v1380 = vmul.f32 %v1374, %v157
  %v1381 = vmul.f32 %v1375, %v155
  %v1382 = vmul.f32 %v1376, %v159
  %v1383 = vmul.f32 %v1377, %v157
  %1390 = vrot.lane.b32.xlu0 %v1378, 1
  %v1391 = vpop.permute.xlu0 %1390
  %1392 = vrot.lane.b32.xlu0 %v1379, 1
  %v1393 = vpop.permute.xlu0 %1392
  %1394 = vrot.lane.b32.xlu0 %v1380, 1
  %v1395 = vpop.permute.xlu0 %1394
  %1396 = vrot.lane.b32.xlu0 %v1381, 1
  %v1397 = vpop.permute.xlu0 %1396
  %1398 = vrot.lane.b32.xlu0 %v1382, 1
  %v1399 = vpop.permute.xlu0 %1398
  %1400 = vrot.lane.b32.xlu0 %v1383, 1
  %v1401 = vpop.permute.xlu0 %1400
  %v1402 = vsel %vm175, %v1391, %v1393
  %v1403 = vsel %vm175, %v1393, %v1395
  %v1404 = vsel %vm175, %v1397, %v1399
  %v1405 = vsel %vm175, %v1399, %v1401
  %1410 = vst [vmem:[#allocation2 + $0x60] sm:$0xff] %v1402
  %1411 = vst [vmem:[#allocation2 + $0x68] sm:$0xff] %v1403
  %1412 = vst [vmem:[#allocation2 + $0x70] sm:$0xff] %v1404
  %1413 = vst [vmem:[#allocation2 + $0x78] sm:$0xff] %v1405
  %v1414 = vld [vmem:[#allocation3 + $0x8] sm:$0xff]
  %v1415 = vld [vmem:[#allocation3 + $0x10] sm:$0xff]
  %v1416 = vld [vmem:[#allocation3 + $0x28] sm:$0xff]
  %v1417 = vld [vmem:[#allocation3 + $0x30] sm:$0xff]
  %1418 = vst [vmem:[#allocation2 + $0x80] sm:$0xff] %v1414
  %1419 = vst [vmem:[#allocation2 + $0x88] sm:$0xff] %v1415
  %1420 = vst [vmem:[#allocation2 + $0x90] sm:$0xff] %v1416
  %1421 = vst [vmem:[#allocation2 + $0x98] sm:$0xff] %v1417
  %v1422 = vld [vmem:[#allocation3 + $0x8] sm:$0xff]
  %v1423 = vld [vmem:[#allocation3 + $0x10] sm:$0xff]
  %v1424 = vld [vmem:[#allocation3 + $0x18] sm:$0xff]
  %v1425 = vld [vmem:[#allocation3 + $0x28] sm:$0xff]
  %v1426 = vld [vmem:[#allocation3 + $0x30] sm:$0xff]
  %v1427 = vld [vmem:[#allocation3 + $0x38] sm:$0xff]
  %v1428 = vmul.f32 %v1422, %v190
  %v1429 = vmul.f32 %v1423, %v193
  %v1430 = vmul.f32 %v1424, %v192
  %v1431 = vmul.f32 %v1425, %v190
  %v1432 = vmul.f32 %v1426, %v193
  %v1433 = vmul.f32 %v1427, %v192
  %1440 = vrot.lane.b32.xlu0 %v1428, 127
  %v1441 = vpop.permute.xlu0 %1440
  %1442 = vrot.lane.b32.xlu0 %v1429, 127
  %v1443 = vpop.permute.xlu0 %1442
  %1444 = vrot.lane.b32.xlu0 %v1430, 127
  %v1445 = vpop.permute.xlu0 %1444
  %1446 = vrot.lane.b32.xlu0 %v1431, 127
  %v1447 = vpop.permute.xlu0 %1446
  %1448 = vrot.lane.b32.xlu0 %v1432, 127
  %v1449 = vpop.permute.xlu0 %1448
  %1450 = vrot.lane.b32.xlu0 %v1433, 127
  %v1451 = vpop.permute.xlu0 %1450
  %v1452 = vsel %vm158, %v1441, %v1443
  %v1453 = vsel %vm158, %v1443, %v1445
  %v1454 = vsel %vm158, %v1447, %v1449
  %v1455 = vsel %vm158, %v1449, %v1451
  %1460 = vst [vmem:[#allocation2 + $0xa0] sm:$0xff] %v1452
  %1461 = vst [vmem:[#allocation2 + $0xa8] sm:$0xff] %v1453
  %1462 = vst [vmem:[#allocation2 + $0xb0] sm:$0xff] %v1454
  %1463 = vst [vmem:[#allocation2 + $0xb8] sm:$0xff] %v1455
  %v1464 = vld [vmem:[#allocation3 + $0x8] sm:$0xff]
  %v1465 = vld [vmem:[#allocation3 + $0x10] sm:$0xff]
  %v1466 = vld [vmem:[#allocation3 + $0x18] sm:$0xff]
  %v1467 = vld [vmem:[#allocation3 + $0x28] sm:$0xff]
  %v1468 = vld [vmem:[#allocation3 + $0x30] sm:$0xff]
  %v1469 = vld [vmem:[#allocation3 + $0x38] sm:$0xff]
  %v1470 = vmul.f32 %v1464, %v219
  %v1471 = vmul.f32 %v1465, %v222
  %v1472 = vmul.f32 %v1466, %v221
  %v1473 = vmul.f32 %v1467, %v219
  %v1474 = vmul.f32 %v1468, %v222
  %v1475 = vmul.f32 %v1469, %v221
  %1482 = vrot.lane.b32.xlu0 %v1470, 113
  %v1483 = vpop.permute.xlu0 %1482
  %1484 = vrot.lane.b32.xlu0 %v1471, 113
  %v1485 = vpop.permute.xlu0 %1484
  %1486 = vrot.lane.b32.xlu0 %v1472, 113
  %v1487 = vpop.permute.xlu0 %1486
  %1488 = vrot.lane.b32.xlu0 %v1473, 113
  %v1489 = vpop.permute.xlu0 %1488
  %1490 = vrot.lane.b32.xlu0 %v1474, 113
  %v1491 = vpop.permute.xlu0 %1490
  %1492 = vrot.lane.b32.xlu0 %v1475, 113
  %v1493 = vpop.permute.xlu0 %1492
  %v1494 = vsel %vm127, %v1483, %v1485
  %v1495 = vsel %vm127, %v1485, %v1487
  %v1496 = vsel %vm127, %v1489, %v1491
  %v1497 = vsel %vm127, %v1491, %v1493
  %1502 = vst [vmem:[#allocation2 + $0xc0] sm:$0xff] %v1494
  %1503 = vst [vmem:[#allocation2 + $0xc8] sm:$0xff] %v1495
  %1504 = vst [vmem:[#allocation2 + $0xd0] sm:$0xff] %v1496
  %1505 = vst [vmem:[#allocation2 + $0xd8] sm:$0xff] %v1497
  %v1506 = vld [vmem:[#allocation3 + $0x8] sm:$0xff]
  %v1507 = vld [vmem:[#allocation3 + $0x10] sm:$0xff]
  %v1508 = vld [vmem:[#allocation3 + $0x18] sm:$0xff]
  %v1509 = vld [vmem:[#allocation3 + $0x28] sm:$0xff]
  %v1510 = vld [vmem:[#allocation3 + $0x30] sm:$0xff]
  %v1511 = vld [vmem:[#allocation3 + $0x38] sm:$0xff]
  %1518 = vrot.lane.b32.xlu0 %v1506, 112
  %v1519 = vpop.permute.xlu0 %1518
  %1520 = vrot.lane.b32.xlu0 %v1507, 112
  %v1521 = vpop.permute.xlu0 %1520
  %1522 = vrot.lane.b32.xlu0 %v1508, 112
  %v1523 = vpop.permute.xlu0 %1522
  %1524 = vrot.lane.b32.xlu0 %v1509, 112
  %v1525 = vpop.permute.xlu0 %1524
  %1526 = vrot.lane.b32.xlu0 %v1510, 112
  %v1527 = vpop.permute.xlu0 %1526
  %1528 = vrot.lane.b32.xlu0 %v1511, 112
  %v1529 = vpop.permute.xlu0 %1528
  %v1530 = vsel %vm256, %v1519, %v1521
  %v1531 = vsel %vm256, %v1521, %v1523
  %v1532 = vsel %vm256, %v1525, %v1527
  %v1533 = vsel %vm256, %v1527, %v1529
  %1538 = vst [vmem:[#allocation2 + $0xe0] sm:$0xff] %v1530
  %1539 = vst [vmem:[#allocation2 + $0xe8] sm:$0xff] %v1531
  %1540 = vst [vmem:[#allocation2 + $0xf0] sm:$0xff] %v1532
  %1541 = vst [vmem:[#allocation2 + $0xf8] sm:$0xff] %v1533
  %v1542 = vld [vmem:[#allocation3 + $0x8] sm:$0xff]
  %v1543 = vld [vmem:[#allocation3 + $0x10] sm:$0xff]
  %v1544 = vld [vmem:[#allocation3 + $0x18] sm:$0xff]
  %v1545 = vld [vmem:[#allocation3 + $0x28] sm:$0xff]
  %v1546 = vld [vmem:[#allocation3 + $0x30] sm:$0xff]
  %v1547 = vld [vmem:[#allocation3 + $0x38] sm:$0xff]
  %v1548 = vmul.f32 %v1542, %v267
  %v1549 = vmul.f32 %v1543, %v270
  %v1550 = vmul.f32 %v1544, %v269
  %v1551 = vmul.f32 %v1545, %v267
  %v1552 = vmul.f32 %v1546, %v270
  %v1553 = vmul.f32 %v1547, %v269
  %1560 = vrot.lane.b32.xlu0 %v1548, 111
  %v1561 = vpop.permute.xlu0 %1560
  %1562 = vrot.lane.b32.xlu0 %v1549, 111
  %v1563 = vpop.permute.xlu0 %1562
  %1564 = vrot.lane.b32.xlu0 %v1550, 111
  %v1565 = vpop.permute.xlu0 %1564
  %1566 = vrot.lane.b32.xlu0 %v1551, 111
  %v1567 = vpop.permute.xlu0 %1566
  %1568 = vrot.lane.b32.xlu0 %v1552, 111
  %v1569 = vpop.permute.xlu0 %1568
  %1570 = vrot.lane.b32.xlu0 %v1553, 111
  %v1571 = vpop.permute.xlu0 %1570
  %v1572 = vsel %vm75, %v1561, %v1563
  %v1573 = vsel %vm75, %v1563, %v1565
  %v1574 = vsel %vm75, %v1567, %v1569
  %v1575 = vsel %vm75, %v1569, %v1571
  %1580 = vst [vmem:[#allocation2 + $0x100] sm:$0xff] %v1572
  %1581 = vst [vmem:[#allocation2 + $0x108] sm:$0xff] %v1573
  %1582 = vst [vmem:[#allocation2 + $0x110] sm:$0xff] %v1574
  %1583 = vst [vmem:[#allocation2 + $0x118] sm:$0xff] %v1575
  %v1584 = vld [vmem:[%s2] sm:$0xff]
  %v1585 = vld [vmem:[#allocation2] sm:$0xff]
  %v1586 = vld [vmem:[#allocation2 + $0x8] sm:$0xff]
  %v1587 = vld [vmem:[#allocation2 + $0x10] sm:$0xff]
  %v1588 = vld [vmem:[#allocation2 + $0x18] sm:$0xff]
  %v1589 = vld [vmem:[#allocation2 + $0x20] sm:$0xff]
  %v1590 = vld [vmem:[#allocation2 + $0x28] sm:$0xff]
  %v1591 = vld [vmem:[#allocation2 + $0x30] sm:$0xff]
  %v1592 = vld [vmem:[#allocation2 + $0x38] sm:$0xff]
  %v1593 = vld [vmem:[#allocation2 + $0x40] sm:$0xff]
  %v1594 = vld [vmem:[#allocation2 + $0x48] sm:$0xff]
  %v1595 = vld [vmem:[#allocation2 + $0x50] sm:$0xff]
  %v1596 = vld [vmem:[#allocation2 + $0x58] sm:$0xff]
  %v1597 = vld [vmem:[#allocation2 + $0x60] sm:$0xff]
  %v1598 = vld [vmem:[#allocation2 + $0x68] sm:$0xff]
  %v1599 = vld [vmem:[#allocation2 + $0x70] sm:$0xff]
  %v1600 = vld [vmem:[#allocation2 + $0x78] sm:$0xff]
  %v1601 = vld [vmem:[#allocation2 + $0x80] sm:$0xff]
  %v1602 = vld [vmem:[#allocation2 + $0x88] sm:$0xff]
  %v1603 = vld [vmem:[#allocation2 + $0x90] sm:$0xff]
  %v1604 = vld [vmem:[#allocation2 + $0x98] sm:$0xff]
  %v1605 = vld [vmem:[#allocation2 + $0xa0] sm:$0xff]
  %v1606 = vld [vmem:[#allocation2 + $0xa8] sm:$0xff]
  %v1607 = vld [vmem:[#allocation2 + $0xb0] sm:$0xff]
  %v1608 = vld [vmem:[#allocation2 + $0xb8] sm:$0xff]
  %v1609 = vld [vmem:[#allocation2 + $0xc0] sm:$0xff]
  %v1610 = vld [vmem:[#allocation2 + $0xc8] sm:$0xff]
  %v1611 = vld [vmem:[#allocation2 + $0xd0] sm:$0xff]
  %v1612 = vld [vmem:[#allocation2 + $0xd8] sm:$0xff]
  %v1613 = vld [vmem:[#allocation2 + $0xe0] sm:$0xff]
  %v1614 = vld [vmem:[#allocation2 + $0xe8] sm:$0xff]
  %v1615 = vld [vmem:[#allocation2 + $0xf0] sm:$0xff]
  %v1616 = vld [vmem:[#allocation2 + $0xf8] sm:$0xff]
  %v1617 = vld [vmem:[#allocation2 + $0x100] sm:$0xff]
  %v1618 = vld [vmem:[#allocation2 + $0x108] sm:$0xff]
  %v1619 = vld [vmem:[#allocation2 + $0x110] sm:$0xff]
  %v1620 = vld [vmem:[#allocation2 + $0x118] sm:$0xff]
  %v1622 = vcombine.high %v1584, %v1584
  %v1623 = vsel %vm111, %v1622, 0
  %1625 = vmatprep.subr.mxu0 %v1586
  %1626 = vmatpush1.msra.mxu0 %v1585
  %1627 = vmatprep.subr.mxu0 %v1588
  %1628 = vmatpush1.msra.mxu0 %v1587
  %1629 = vmatprep.subr.mxu0 %v1590
  %1630 = vmatpush1.msra.mxu0 %v1589
  %1631 = vmatprep.subr.mxu0 %v1592
  %1632 = vmatpush1.msra.mxu0 %v1591
  %1633 = vmatprep.subr.mxu0 %v1594
  %1634 = vmatpush1.msra.mxu0 %v1593
  %1635 = vmatprep.subr.mxu0 %v1596
  %1636 = vmatpush1.msra.mxu0 %v1595
  %1637 = vmatprep.subr.mxu0 %v1598
  %1638 = vmatpush1.msra.mxu0 %v1597
  %1639 = vmatprep.subr.mxu0 %v1600
  %1640 = vmatpush1.msra.mxu0 %v1599
  %1641 = vmatprep.subr.mxu0 %v1602
  %1642 = vmatpush1.msra.mxu0 %v1601
  %1643 = vmatprep.subr.mxu0 %v1604
  %1644 = vmatpush1.msra.mxu0 %v1603
  %1645 = vmatprep.subr.mxu0 %v1606
  %1646 = vmatpush1.msra.mxu0 %v1605
  %1647 = vmatprep.subr.mxu0 %v1608
  %1648 = vmatpush1.msra.mxu0 %v1607
  %1649 = vmatprep.subr.mxu0 %v1610
  %1650 = vmatpush1.msra.mxu0 %v1609
  %1651 = vmatprep.subr.mxu0 %v1612
  %1652 = vmatpush1.msra.mxu0 %v1611
  %1653 = vmatprep.subr.mxu0 %v1614
  %1654 = vmatpush1.msra.mxu0 %v1613
  %1655 = vmatprep.subr.mxu0 %v1616
  %1656 = vmatpush1.msra.mxu0 %v1615
  %1657 = vmatprep.subr.mxu0 %v1618
  %1658 = vmatpush1.msra.mxu0 %v1617
  %1659 = vmatprep.subr.mxu0 %v1620
  %1660 = vmatpush1.msra.mxu0 %v1619
  %1661 = vmatprep.subr.mxu0 0.0
  %1662 = vmatpush1.msra.mxu0 0.0
  %1663 = vmatprep.subr.mxu0 0.0
  %1664 = vmatpush1.msra.mxu0 0.0
  %1665 = vmatprep.subr.mxu0 0.0
  %1666 = vmatpush1.msra.mxu0 0.0
  %1667 = vmatprep.subr.mxu0 0.0
  %1668 = vmatpush1.msra.mxu0 0.0
  %1669 = vmatprep.subr.mxu0 0.0
  %1670 = vmatpush1.msra.mxu0 0.0
  %1671 = vmatprep.subr.mxu0 0.0
  %1672 = vmatpush1.msra.mxu0 0.0
  %1673 = vmatprep.subr.mxu0 0.0
  %1674 = vmatpush1.msra.mxu0 0.0
  %1675 = vmatprep.subr.mxu0 0.0
  %1676 = vmatpush1.msra.mxu0 0.0
  %1677 = vmatprep.subr.mxu0 0.0
  %1678 = vmatpush1.msra.mxu0 0.0
  %1679 = vmatprep.subr.mxu0 0.0
  %1680 = vmatpush1.msra.mxu0 0.0
  %1681 = vmatprep.subr.mxu0 0.0
  %1682 = vmatpush1.msra.mxu0 0.0
  %1683 = vmatprep.subr.mxu0 0.0
  %1684 = vmatpush1.msra.mxu0 0.0
  %1685 = vmatprep.subr.mxu0 0.0
  %1686 = vmatpush1.msra.mxu0 0.0
  %1687 = vmatprep.subr.mxu0 0.0
  %1688 = vmatpush1.msra.mxu0 0.0
  %1689 = vmatprep.mubr.f32.mxu0 %v1623
  %1690 = vmatmul.mubr.f32.gmra.mrb[0].mxu0 %v1584
  %v1691 = vpop.f32.mrb[0].mxu0
  %v1692 = vadd.f32 %v1158, %v1691
  %v1693 = vpop.f32.mrb[0].mxu0
  %v1694 = vadd.f32 %v1158, %v1693
  %1695 = vdwg.mxu0
  %v1698 = vcombine.low %v1692, %v1694
  %s1700 = scalar_lea.vmem %s4, 8
  %1701 = vst [vmem:[%s1700] sm:$0xff] %v1698
  // Predicated region
  $region18: #{model_forward.1} parent=0 // pred_check
    _
  $region19: #{model_forward.1} parent=0 // pred_check_branch
    %1703 = sbr.rel (0) target = $region21
  $region20: #{model_forward.1} parent=0 // pred_region
    _
  $region21: #{model_forward.1} parent=0 // pred_fallthru
    _
  // Predicated region
  $region22: #{model_forward.1} parent=0 // pred_check
    _
  $region23: #{model_forward.1} parent=0 // pred_check_branch
    %1705 = sbr.rel (0) target = $region25
  $region24: #{model_forward.1} parent=0 // pred_region
    _
  $region25: #{model_forward.1} parent=0 // pred_fallthru
    _

</llo_original>
